<compile_context>
chip_gen: v7x
topology: tpu7x:2x2x1
jax: 0.10.0
libtpu: 0.0.40
codegen_flags: <defaults>
</compile_context>

<pallas_src>
import functools

import jax
import jax.numpy as jnp
from jax.experimental import pallas as pl
from jax.experimental.pallas import tpu as pltpu


# ---------------------------------------------------------------------------
# helpers
# ---------------------------------------------------------------------------
def _round_up(x, m):
    return (x + m - 1) // m * m


def _largest_divisor_leq(n, cap):
    cap = max(1, min(n, cap))
    for d in range(cap, 0, -1):
        if n % d == 0:
            return d
    return 1


_VMEM_LIMIT = 48 * 1024 * 1024  # fits v7x (64 MiB physical) with headroom


# ---------------------------------------------------------------------------
# Pallas kernel 1: direct 3x3 stride-1 pad-1 convolution (no im2col in HBM)
# ---------------------------------------------------------------------------
def _conv3x3_kernel(x_hbm, w_ref, b_ref, o_ref, xbuf, xbf, acc_ref, sem,
                    *, th, n_rb, wo, cin, apply_relu):
    i = pl.program_id(0)          # batch * row-block
    j = pl.program_id(1)          # cout tile
    n = i // n_rb
    rb = i % n_rb

    # Fetch the (th + 2)-row halo slab once per row block; it is reused for
    # every cout tile (j) of this row block.
    # TODO(synk): cross-row-block prefetch (double-buffered slab) would hide
    # this DMA fully, but would break under megacore splitting of the i axis.
    @pl.when(j == 0)
    def _load():
        cp = pltpu.make_async_copy(
            x_hbm.at[n, pl.ds(rb * th, th + 2)], xbuf, sem.at[0])
        cp.start()
        cp.wait()
        xbf[...] = xbuf[...].astype(jnp.bfloat16)

    # 9 accumulating MXU matmuls (one per filter tap) in bf16, f32 accumulator.
    for t in range(9):
        ky, kx = t // 3, t % 3
        a = xbf[ky:ky + th, kx:kx + wo, :].reshape(th * wo, cin)
        contrib = jnp.dot(a, w_ref[t], preferred_element_type=jnp.float32)
        if t == 0:
            acc_ref[...] = contrib
        else:
            acc_ref[...] += contrib

    out = acc_ref[...] + b_ref[...]
    if apply_relu:
        out = jnp.maximum(out, 0.0)
    o_ref[0] = out.astype(o_ref.dtype)


def conv3x3_direct(x, w9, b, apply_relu):
    """x: (N, H, W, Cin) f32; w9: (9, Cin, Coutp) bf16; b: (1, Coutp) f32."""
    N, H, W, cin = x.shape
    coutp = w9.shape[2]
    tn = min(coutp, 256)

    # Pick the number of output rows per step from a ~2 MiB VMEM budget for
    # both the input slab and the output/accumulator tile.
    budget = 2 * 1024 * 1024
    t1 = budget // (4 * (W + 2) * cin) - 2
    t2 = budget // (4 * W * tn)
    th = int(max(1, min(H, t1, t2, 64)))
    n_rb = -(-H // th)
    Hp = n_rb * th

    # zero-pad: 1 halo row/col on each side (+ extra rows so Hp | th).
    xpad = jnp.pad(x, ((0, 0), (1, 1 + Hp - H), (1, 1), (0, 0)))

    grid = (N * n_rb, coutp // tn)
    kernel = functools.partial(_conv3x3_kernel, th=th, n_rb=n_rb, wo=W,
                               cin=cin, apply_relu=apply_relu)
    out = pl.pallas_call(
        kernel,
        out_shape=jax.ShapeDtypeStruct((N * n_rb, th * W, coutp), jnp.float32),
        grid_spec=pltpu.PrefetchScalarGridSpec(
            num_scalar_prefetch=0,
            grid=grid,
            in_specs=[
                pl.BlockSpec(memory_space=pl.ANY),                    # act (HBM)
                pl.BlockSpec((9, cin, tn), lambda i, j: (0, 0, j)),   # weights
                pl.BlockSpec((1, tn), lambda i, j: (0, j)),           # bias
            ],
            out_specs=pl.BlockSpec((1, th * W, tn), lambda i, j: (i, 0, j)),
            scratch_shapes=[
                pltpu.VMEM((th + 2, W + 2, cin), jnp.float32),   # DMA slab
                pltpu.VMEM((th + 2, W + 2, cin), jnp.bfloat16),  # bf16 slab
                pltpu.VMEM((th * W, tn), jnp.float32),           # accumulator
                pltpu.SemaphoreType.DMA((1,)),
            ],
        ),
        compiler_params=pltpu.CompilerParams(
            dimension_semantics=("parallel", "arbitrary"),
            vmem_limit_bytes=_VMEM_LIMIT),
    )(xpad, w9, b)
    return out.reshape(N, Hp, W, coutp)[:, :H]


# ---------------------------------------------------------------------------
# Pallas kernel 2: tiled bf16 matmul + bias (+ReLU) -- 1x1 convs / fallback
# ---------------------------------------------------------------------------
def _matmul_bias_kernel(a_ref, w_ref, b_ref, o_ref, *, apply_relu):
    out = jnp.dot(a_ref[...], w_ref[...], preferred_element_type=jnp.float32)
    out = out + b_ref[...]
    if apply_relu:
        out = jnp.maximum(out, 0.0)
    o_ref[...] = out.astype(o_ref.dtype)


def matmul_bias(a, w, b, apply_relu):
    """a: (M, K); w: (K, Np) bf16 (pre-padded); b: (1, Np) f32 -> (M, Np)."""
    M, K = a.shape
    Np = w.shape[1]
    tn = min(Np, 256)

    # adaptive tm: grow when K is small so the MXU/DMA is actually used.
    cap = max(8, (2 * 1024 * 1024 // (2 * max(K, 1))) // 8 * 8)
    tm = min(_round_up(M, 8), 1024, cap)
    Mp = _round_up(M, tm)

    a = a.astype(jnp.bfloat16)
    if Mp != M:
        a = jnp.pad(a, ((0, Mp - M), (0, 0)))

    grid = (Mp // tm, Np // tn)
    out = pl.pallas_call(
        functools.partial(_matmul_bias_kernel, apply_relu=apply_relu),
        out_shape=jax.ShapeDtypeStruct((Mp, Np), jnp.float32),
        grid_spec=pltpu.PrefetchScalarGridSpec(
            num_scalar_prefetch=0,
            grid=grid,
            in_specs=[
                pl.BlockSpec((tm, K), lambda i, j: (i, 0)),
                pl.BlockSpec((K, tn), lambda i, j: (0, j)),
                pl.BlockSpec((1, tn), lambda i, j: (0, j)),
            ],
            out_specs=pl.BlockSpec((tm, tn), lambda i, j: (i, j)),
        ),
        compiler_params=pltpu.CompilerParams(
            dimension_semantics=("parallel", "parallel"),
            vmem_limit_bytes=_VMEM_LIMIT),
    )(a, w, b)
    return out[:M]


def _im2col(x, ksz, stride, pad):
    """x: (N, H, W, C) -> patches (N*Ho*Wo, ksz*ksz*C), Ho, Wo."""
    if pad > 0:
        x = jnp.pad(x, ((0, 0), (pad, pad), (pad, pad), (0, 0)))
    N, Hp, Wp, C = x.shape
    Ho = (Hp - ksz) // stride + 1
    Wo = (Wp - ksz) // stride + 1
    cols = []
    for dy in range(ksz):
        for dx in range(ksz):
            cols.append(x[:, dy:dy + stride * Ho:stride,
                          dx:dx + stride * Wo:stride, :])
    patches = jnp.concatenate(cols, axis=-1)
    return patches.reshape(N * Ho * Wo, ksz * ksz * C), Ho, Wo


def conv2d(x, p, stride, pad, relu):
    """Dispatch a convolution to the best Pallas path."""
    cin, cout, ksz = p['cin'], p['cout'], p['ksz']
    w, b = p['w'], p['b']
    Np = w.shape[1]
    N, H, W, _ = x.shape
    if ksz == 1 and stride == 1 and pad == 0:
        y = matmul_bias(x.reshape(N * H * W, cin), w, b, relu)
        y = y.reshape(N, H, W, Np)
    elif ksz == 3 and stride == 1 and pad == 1 and cin >= 8 and W % 8 == 0:
        y = conv3x3_direct(x, w.reshape(9, cin, Np), b, relu)
    else:
        # small layers only (first conv, stride-2 extras, tiny-spatial tails)
        patches, Ho, Wo = _im2col(x, ksz, stride, pad)
        y = matmul_bias(patches, w, b, relu).reshape(N, Ho, Wo, Np)
    if Np != cout:
        y = y[..., :cout]
    return y


# ---------------------------------------------------------------------------
# Pallas kernel 3: row-tiled L2Norm over the channel dim
# ---------------------------------------------------------------------------
def _l2norm_kernel(x_ref, s_ref, o_ref):
    x = x_ref[...]
    ssum = jnp.sum(x * x, axis=-1, keepdims=True)
    inv = jax.lax.rsqrt(ssum + 1e-20)          # EUP; matches x/(||x||+1e-10)
    o_ref[...] = x * inv * s_ref[...]


def l2norm_pallas(x, scale):
    """x: (N, H, W, C) NHWC; scale: (C,)."""
    N, H, W, C = x.shape
    M = N * H * W
    tm = min(_round_up(M, 8), 512)
    Mp = _round_up(M, tm)
    xf = x.reshape(M, C)
    if Mp != M:
        xf = jnp.pad(xf, ((0, Mp - M), (0, 0)))
    out = pl.pallas_call(
        _l2norm_kernel,
        out_shape=jax.ShapeDtypeStruct((Mp, C), jnp.float32),
        grid_spec=pltpu.PrefetchScalarGridSpec(
            num_scalar_prefetch=0,
            grid=(Mp // tm,),
            in_specs=[
                pl.BlockSpec((tm, C), lambda i: (i, 0)),
                pl.BlockSpec((1, C), lambda i: (0, 0)),
            ],
            out_specs=pl.BlockSpec((tm, C), lambda i: (i, 0)),
        ),
        compiler_params=pltpu.CompilerParams(
            dimension_semantics=("parallel",)),
    )(xf, scale.reshape(1, C))
    return out[:M].reshape(N, H, W, C)


# ---------------------------------------------------------------------------
# Pallas kernel 4: row-tiled 2x2 / stride-2 max pool
# ---------------------------------------------------------------------------
def _maxpool_kernel(x_ref, o_ref, *, c):
    x = x_ref[...]                              # (th, 2, Wo, 2C)
    m = jnp.maximum(x[:, 0], x[:, 1])           # max over the H pair
    m = jnp.maximum(m, pltpu.roll(m, shift=c, axis=2))   # max over the W pair
    o_ref[...] = m[:, :, :c]


def maxpool2x2(x, ceil_mode):
    N, H, W, C = x.shape
    if ceil_mode:
        He, We = _round_up(H, 2), _round_up(W, 2)
        if (He, We) != (H, W):
            x = jnp.pad(x, ((0, 0), (0, He - H), (0, We - W), (0, 0)),
                        constant_values=-jnp.inf)
    else:
        He, We = (H // 2) * 2, (W // 2) * 2
        if (He, We) != (H, W):
            x = x[:, :He, :We, :]
    Ho, Wo = He // 2, We // 2

    # pure (layout-preserving) reshape that exposes the 2x2 window structure
    xr = x.reshape(N * Ho, 2, Wo, 2 * C)
    cap = max(1, (2 * 1024 * 1024) // (16 * Wo * C))
    th = _largest_divisor_leq(Ho, cap)

    out = pl.pallas_call(
        functools.partial(_maxpool_kernel, c=C),
        out_shape=jax.ShapeDtypeStruct((N * Ho, Wo, C), jnp.float32),
        grid_spec=pltpu.PrefetchScalarGridSpec(
            num_scalar_prefetch=0,
            grid=((N * Ho) // th,),
            in_specs=[pl.BlockSpec((th, 2, Wo, 2 * C), lambda i: (i, 0, 0, 0))],
            out_specs=pl.BlockSpec((th, Wo, C), lambda i: (i, 0, 0)),
        ),
        compiler_params=pltpu.CompilerParams(
            dimension_semantics=("parallel",)),
    )(xr)
    return out.reshape(N, Ho, Wo, C)


# ---------------------------------------------------------------------------
# S3FD architecture description + deterministic synthetic parameters
# ---------------------------------------------------------------------------
def make_vgg_layers():
    cfg = [64, 64, 'M', 128, 128, 'M', 256, 256, 256, 'C',
           512, 512, 512, 'M', 512, 512, 512]
    layers = []
    in_ch = 3
    for v in cfg:
        if v == 'M':
            layers.append(('pool_floor',))
        elif v == 'C':
            layers.append(('pool_ceil',))
        else:
            layers.append(('conv', in_ch, v, 3, 1, 1))    # k=3, stride=1, pad=1
            layers.append(('relu',))
            in_ch = v
    layers.append(('pool_floor',))                         # pool5
    layers.append(('conv', 512, 1024, 3, 1, 1))            # conv6
    layers.append(('relu',))
    layers.append(('conv', 1024, 1024, 1, 1, 0))           # conv7
    layers.append(('relu',))
    return layers


# extras derived from add_extras([256,'S',512,128,'S',256], 1024)
EXTRAS_DESC = [(1024, 256, 1, 1, 0),
               (256, 512, 3, 2, 1),
               (512, 128, 1, 1, 0),
               (128, 256, 3, 2, 1)]

HEAD_IN = [256, 512, 512, 1024, 512, 256]


def init_params(key, num_classes=2):
    vgg_layers = make_vgg_layers()
    keys = iter(jax.random.split(key, 64))

    def conv_param(cin, cout, ksz):
        # TODO(synk): to load real PyTorch weights (Cout,Cin,kh,kw) transpose
        # to (kh,kw,Cin,Cout) before flattening to (ksz*ksz*Cin, Cout).
        K = ksz * ksz * cin
        Np = _round_up(cout, 128)
        w = jax.random.normal(next(keys), (K, cout), jnp.float32) * 0.01
        w = jnp.pad(w, ((0, 0), (0, Np - cout))).astype(jnp.bfloat16)
        b = jnp.pad(jnp.full((1, cout), 0.02, jnp.float32),
                    ((0, 0), (0, Np - cout)))
        return dict(w=w, b=b, cin=cin, cout=cout, ksz=ksz)

    vgg_params = {}
    for k, layer in enumerate(vgg_layers):
        if layer[0] == 'conv':
            _, cin, cout, ksz, _, _ = layer
            vgg_params[k] = conv_param(cin, cout, ksz)

    extras = [conv_param(ci, co, ks) for (ci, co, ks, _, _) in EXTRAS_DESC]

    conf_out = [4] + [num_classes] * 5    # first conf head is 3+1 channels
    # fused head: one 3x3 conv per source with [loc(4) ++ conf(conf_ch)] outputs
    head = [conv_param(ci, 4 + co, 3) for ci, co in zip(HEAD_IN, conf_out)]

    l2norm = [jnp.full((256,), 10.0, jnp.float32),
              jnp.full((512,), 8.0, jnp.float32),
              jnp.full((512,), 5.0, jnp.float32)]

    return dict(vgg_layers=vgg_layers, vgg=vgg_params, extras=extras,
                head=head, conf_out=conf_out, l2norm=l2norm)


# ---------------------------------------------------------------------------
# forward pass (phase = 'train': no softmax at the end)
# ---------------------------------------------------------------------------
def s3fd_forward(x_nchw, params, num_classes=2):
    batch = x_nchw.shape[0]
    x = jnp.transpose(x_nchw, (0, 2, 3, 1)).astype(jnp.float32)  # NCHW -> NHWC

    sources, det_dims = [], []
    for k, layer in enumerate(params['vgg_layers']):
        kind = layer[0]
        if kind == 'conv':
            _, _, _, _, stride, pad = layer
            x = conv2d(x, params['vgg'][k], stride, pad, relu=True)  # ReLU fused
        elif kind == 'pool_floor':
            x = maxpool2x2(x, ceil_mode=False)
        elif kind == 'pool_ceil':
            x = maxpool2x2(x, ceil_mode=True)
        # 'relu' entries are already fused into the conv kernels

        if k == 15:
            sources.append(l2norm_pallas(x, params['l2norm'][0]))
            det_dims.append((x.shape[1], x.shape[2]))
        elif k == 22:
            sources.append(l2norm_pallas(x, params['l2norm'][1]))
            det_dims.append((x.shape[1], x.shape[2]))
        elif k == 29:
            sources.append(l2norm_pallas(x, params['l2norm'][2]))
            det_dims.append((x.shape[1], x.shape[2]))

    sources.append(x)                          # conv7 (fc7) output
    det_dims.append((x.shape[1], x.shape[2]))

    for k, (desc, p) in enumerate(zip(EXTRAS_DESC, params['extras'])):
        _, _, _, stride, pad = desc
        x = conv2d(x, p, stride, pad, relu=True)          # F.relu fused
        if k % 2 == 1:
            sources.append(x)
            det_dims.append((x.shape[1], x.shape[2]))

    loc_parts, conf_parts = [], []
    for idx, (src, hp) in enumerate(zip(sources, params['head'])):
        y = conv2d(src, hp, 1, 1, relu=False)             # fused loc++conf head
        l_out = y[..., :4]
        c_out = y[..., 4:]
        if idx == 0:
            # max over the first 3 "background" channels, keep the rest
            max_conf = jnp.max(c_out[..., 0:3], axis=-1, keepdims=True)
            c_out = jnp.concatenate([max_conf, c_out[..., 3:]], axis=-1)
        loc_parts.append(l_out.reshape(batch, -1))
        conf_parts.append(c_out.reshape(batch, -1))

    loc = jnp.concatenate(loc_parts, axis=1).reshape(batch, -1, 4)
    conf = jnp.concatenate(conf_parts, axis=1).reshape(batch, -1, num_classes)
    detection_dimension = jnp.array(det_dims, dtype=jnp.float32)

    # TODO(synk): phase='test' applies softmax(dim=-1) to conf (trivial jnp
    # glue); the reference path exercised here is phase='train' (raw conf).
    return loc, conf, detection_dimension


# ---------------------------------------------------------------------------
if __name__ == "__main__":
    num_classes = 2
    key = jax.random.PRNGKey(0)
    pkey, xkey = jax.random.split(key)

    params = init_params(pkey, num_classes=num_classes)

    # smallest input that survives all 5 pools + 2 stride-2 extras: 32x32
    x = jax.random.normal(xkey, (2, 3, 32, 32), jnp.float32)   # NCHW like PyTorch

    loc, conf, det = s3fd_forward(x, params, num_classes=num_classes)
    jax.block_until_ready((loc, conf, det))

    assert loc.shape[0] == 2 and loc.shape[2] == 4
    assert conf.shape[0] == 2 and conf.shape[2] == num_classes
    assert loc.shape[1] == conf.shape[1]          # same number of anchors
    assert det.shape == (6, 2)

    print("KERNEL_OK")
</pallas_src>

<mosaic_0001>
module attributes {stable_mosaic.version = 11 : i64} {
  func.func @_matmul_bias_kernel(%arg0: i32, %arg1: i32, %arg2: memref<1024x27xbf16, #tpu.memory_space<vmem>>, %arg3: memref<27x128xbf16, #tpu.memory_space<vmem>>, %arg4: memref<1x128xf32, #tpu.memory_space<vmem>>, %arg5: memref<1024x128xf32, #tpu.memory_space<vmem>>) attributes {dimension_semantics = [#tpu.dimension_semantics<parallel>, #tpu.dimension_semantics<parallel>], iteration_bounds = array<i64: 2, 1>, scalar_prefetch = 0 : i64, scratch_operands = 0 : i64, tpu.core_type = #tpu.core_type<tc>, window_params = [{transform_indices = @transform_0, window_bounds = array<i64: 1024, 27>}, {transform_indices = @transform_1, window_bounds = array<i64: 27, 128>}, {transform_indices = @transform_2, window_bounds = array<i64: 1, 128>}, {transform_indices = @transform_3, window_bounds = array<i64: 1024, 128>}]} {
    %c0 = arith.constant 0 : index
    %c0_0 = arith.constant 0 : index
    %0 = vector.load %arg2[%c0, %c0_0] : memref<1024x27xbf16, #tpu.memory_space<vmem>>, vector<1024x27xbf16>
    %c0_1 = arith.constant 0 : index
    %c0_2 = arith.constant 0 : index
    %1 = vector.load %arg3[%c0_1, %c0_2] : memref<27x128xbf16, #tpu.memory_space<vmem>>, vector<27x128xbf16>
    %cst = arith.constant dense<0.000000e+00> : vector<1024x128xf32>
    %2 = tpu.matmul %0, %1, %cst {dimension_numbers = #tpu.dot_dimension_numbers<[1], [0], [0], [1], [0, 0, 1, 1], [], []>} : vector<1024x27xbf16>, vector<27x128xbf16>, vector<1024x128xf32> -> vector<1024x128xf32>
    %c0_3 = arith.constant 0 : index
    %c0_4 = arith.constant 0 : index
    %3 = vector.load %arg4[%c0_3, %c0_4] : memref<1x128xf32, #tpu.memory_space<vmem>>, vector<1x128xf32>
    %4 = vector.broadcast %3 : vector<1x128xf32> to vector<1024x128xf32>
    %5 = arith.addf %2, %4 : vector<1024x128xf32>
    %cst_5 = arith.constant 0.000000e+00 : f32
    %6 = vector.broadcast %cst_5 : f32 to vector<1024x128xf32>
    %7 = arith.maximumf %5, %6 : vector<1024x128xf32>
    %c0_6 = arith.constant 0 : index
    %c0_7 = arith.constant 0 : index
    %8 = vector.load %arg5[%c0_6, %c0_7] : memref<1024x128xf32, #tpu.memory_space<vmem>>, vector<1024x128xf32>
    tpu.vector_store %arg5[%c0_6, %c0_7], %7 {strides = array<i32>} : memref<1024x128xf32, #tpu.memory_space<vmem>>, vector<1024x128xf32>,
    return
  }
  func.func @transform_0(%arg0: i32, %arg1: i32) -> (i32, i32) {
    %c0_i32 = arith.constant 0 : i32
    %c0_i32_0 = arith.constant 0 : i32
    return %arg0, %c0_i32 : i32, i32
  }
  func.func @transform_1(%arg0: i32, %arg1: i32) -> (i32, i32) {
    %c0_i32 = arith.constant 0 : i32
    %c0_i32_0 = arith.constant 0 : i32
    return %c0_i32, %arg1 : i32, i32
  }
  func.func @transform_2(%arg0: i32, %arg1: i32) -> (i32, i32) {
    %c0_i32 = arith.constant 0 : i32
    %c0_i32_0 = arith.constant 0 : i32
    return %c0_i32, %arg1 : i32, i32
  }
  func.func @transform_3(%arg0: i32, %arg1: i32) -> (i32, i32) {
    %c0_i32 = arith.constant 0 : i32
    return %arg0, %arg1 : i32, i32
  }
}

</mosaic_0001>

<llo_original>
// kernel: tpu_custom_call.1
$region0: #{tpu_custom_call.1}
  #allocation0 [shape = 'u32[]', space=smem, size = 0x4, offset = 0x4, fixed_abs, tag = 'smem constant byte address 0x4 - core index']
  #allocation1 [shape = 'u32[144,128]{1,0:T(1,128)}', space=vmem, size = 0x12000, scoped, tag = 'internal scratch']
  %s0 = inlined_call_operand.vmem [shape: bf16[2048,27], index: 0, kind: input, shape index: {}]
  %s1 = inlined_call_operand.vmem [shape: bf16[27,128], index: 1, kind: input, shape index: {}]
  %s2 = inlined_call_operand.vmem [shape: f32[1,128], index: 2, kind: input, shape index: {}]
  %s3 = inlined_call_operand.hbm [shape: f32[2048,128], index: 3, kind: output, shape index: {}]
  %s4 = sld [smem:[#allocation0]]
  $region45: #{tpu_custom_call.1} parent=0
    _
  %s6 = ssub.s32 1, %s4
  %s7 = scalar_select 0, %s6, %s4
  $region1: #{tpu_custom_call.1} parent=0
    #allocation2 [shape = 'u8[1048576]{0}', space=vmem, size = 0x100000, scoped, tag = 'output window, operand 0']
    #allocation3 [shape = 's32[2]{0}', space=sflag, size = 0x8, scoped, tag = 'scoped memory for tpu_custom_call.1']
    %8 = vsyncpa [#allocation3], 0
    %s9 = scalar_lea.sflag [#allocation3], 1
    %10 = vsyncpa %s9, 0
    loop: start=0, step=1, limit=4
    $region2: #{tpu_custom_call.1} parent=1 // loop_pre_header
      _
    $region3: #{tpu_custom_call.1} parent=1 // loop_header
      %s12 = sphi 0, %s16
      %p13 = scmp.ge.s32.totalorder %s12, 4
      %s19 = sphi 0, %s31
      %s20 = sphi 0, %s27
      %s21 = sphi 0, %s19
      %s22 = sphi 0, %s20
      %s23 = sphi 0, %s21
      %s24 = sphi 0, %s22
      %s34 = sphi 0, %s36
      %s37 = sphi 0, %s34
      %s38 = sphi 0, %s37
      %s54 = sphi 0, %s38
      %s60 = sphi 0, %s62
      %s63 = sphi 0, %s60
      %s64 = sphi 0, %s63
      %s80 = sphi 0, %s64
      %s86 = sphi 0, %s88
      %s89 = sphi 0, %s86
      %s90 = sphi 0, %s89
      %s106 = sphi 0, %s90
      %s114 = sphi 0, %s116
      %s117 = sphi 0, %s114
      %s118 = sphi 0, %s117
      %s134 = sphi 0, %s118
    $region4: #{tpu_custom_call.1} parent=1 // loop_header_branch
      %15 = sbr.rel (%p13) target = $region8
    $region5: #{tpu_custom_call.1} parent=1 // loop_body
      %s17 = ssub.s32 %s12, 1
      %s18 = ssub.s32 %s12, 2
      %s25 = sadd.s32 1, %s20
      %p26 = scmp.ge.s32.totalorder %s25, 1
      %s27 = scalar_select %p26, 0, %s25
      %s28 = sadd.s32 1, %s19
      %s29 = scalar_select %p26, %s28, %s19
      %p30 = scmp.ge.s32.totalorder %s29, 2
      %s31 = scalar_select %p30, 0, %s29
      %s32 = ssub.s32 %s19, %s31
      %p33 = scmp.eq.s32.totalorder %s32, 0
      %s35 = sadd.s32 %s34, 1
      %s36 = scalar_select %p33, %s34, %s35
      %p39 = pneg %p33
      %p40 = scmp.eq.s32.totalorder %s12, 1
      %p41 = por %p39, %p40
      %p42 = scmp.ne.s32.totalorder %s34, %s37
      %p43 = scmp.eq.s32.totalorder %s12, 0
      %p44 = por %p42, %p43
      %p45 = scmp.ne.s32.totalorder %s34, %s37
      %p46 = scmp.eq.s32.totalorder %s17, 1
      %p47 = por %p45, %p46
      %p48 = scmp.ne.s32.totalorder %s37, %s38
      %p49 = scmp.eq.s32.totalorder %s17, 0
      %p50 = por %p48, %p49
      %p51 = scmp.ne.s32.totalorder %s37, %s38
      %p52 = scmp.eq.s32.totalorder %s18, 1
      %p53 = por %p51, %p52
      %p55 = scmp.ne.s32.totalorder %s38, %s54
      %p56 = scmp.eq.s32.totalorder %s18, 0
      %p57 = por %p55, %p56
      %s58 = ssub.s32 %s20, %s27
      %p59 = scmp.eq.s32.totalorder %s58, 0
      %s61 = sadd.s32 %s60, 1
      %s62 = scalar_select %p59, %s60, %s61
      %p65 = pneg %p59
      %p66 = scmp.eq.s32.totalorder %s12, 1
      %p67 = por %p65, %p66
      %p68 = scmp.ne.s32.totalorder %s60, %s63
      %p69 = scmp.eq.s32.totalorder %s12, 0
      %p70 = por %p68, %p69
      %p71 = scmp.ne.s32.totalorder %s60, %s63
      %p72 = scmp.eq.s32.totalorder %s17, 1
      %p73 = por %p71, %p72
      %p74 = scmp.ne.s32.totalorder %s63, %s64
      %p75 = scmp.eq.s32.totalorder %s17, 0
      %p76 = por %p74, %p75
      %p77 = scmp.ne.s32.totalorder %s63, %s64
      %p78 = scmp.eq.s32.totalorder %s18, 1
      %p79 = por %p77, %p78
      %p81 = scmp.ne.s32.totalorder %s64, %s80
      %p82 = scmp.eq.s32.totalorder %s18, 0
      %p83 = por %p81, %p82
      %s84 = ssub.s32 %s20, %s27
      %p85 = scmp.eq.s32.totalorder %s84, 0
      %s87 = sadd.s32 %s86, 1
      %s88 = scalar_select %p85, %s86, %s87
      %p91 = pneg %p85
      %p92 = scmp.eq.s32.totalorder %s12, 1
      %p93 = por %p91, %p92
      %p94 = scmp.ne.s32.totalorder %s86, %s89
      %p95 = scmp.eq.s32.totalorder %s12, 0
      %p96 = por %p94, %p95
      %p97 = scmp.ne.s32.totalorder %s86, %s89
      %p98 = scmp.eq.s32.totalorder %s17, 1
      %p99 = por %p97, %p98
      %p100 = scmp.ne.s32.totalorder %s89, %s90
      %p101 = scmp.eq.s32.totalorder %s17, 0
      %p102 = por %p100, %p101
      %p103 = scmp.ne.s32.totalorder %s89, %s90
      %p104 = scmp.eq.s32.totalorder %s18, 1
      %p105 = por %p103, %p104
      %p107 = scmp.ne.s32.totalorder %s90, %s106
      %p108 = scmp.eq.s32.totalorder %s18, 0
      %p109 = por %p107, %p108
      %s110 = ssub.s32 %s19, %s31
      %s111 = ssub.s32 %s20, %s27
      %s112 = sor.u32 %s110, %s111
      %p113 = scmp.eq.s32.totalorder %s112, 0
      %s115 = sadd.s32 %s114, 1
      %s116 = scalar_select %p113, %s114, %s115
      %p119 = pneg %p113
      %p120 = scmp.eq.s32.totalorder %s12, 1
      %p121 = por %p119, %p120
      %p122 = scmp.ne.s32.totalorder %s114, %s117
      %p123 = scmp.eq.s32.totalorder %s12, 0
      %p124 = por %p122, %p123
      %p125 = scmp.ne.s32.totalorder %s114, %s117
      %p126 = scmp.eq.s32.totalorder %s17, 1
      %p127 = por %p125, %p126
      %p128 = scmp.ne.s32.totalorder %s117, %s118
      %p129 = scmp.eq.s32.totalorder %s17, 0
      %p130 = por %p128, %p129
      %p131 = scmp.ne.s32.totalorder %s117, %s118
      %p132 = scmp.eq.s32.totalorder %s18, 1
      %p133 = por %p131, %p132
      %p135 = scmp.ne.s32.totalorder %s118, %s134
      %p136 = scmp.eq.s32.totalorder %s18, 0
      %p137 = por %p135, %p136
      %p138 = scmp.le.s32.totalorder 1, %s12
      %p139 = scmp.lt.s32.totalorder %s12, 3
      %p140 = pnand %p138, %p139
      %p141 = pneg %p140
      // Predicated region
      $region9: #{tpu_custom_call.1} parent=5 // pred_check
        _
      $region10: #{tpu_custom_call.1} parent=5 // pred_check_branch
        %143 = sbr.rel (%p140) target = $region12
      $region11: #{tpu_custom_call.1} parent=5 // pred_region
        %s144 = ssub.s32 %s12, 1
        // Predicated region
        $region13: #{tpu_custom_call.1} parent=11 // pred_check
          %p145 = pneg %p76
        $region14: #{tpu_custom_call.1} parent=11 // pred_check_branch
          %147 = sbr.rel (%p145) target = $region16
        $region15: #{tpu_custom_call.1} parent=11 // pred_region
          %p148 = scmp.lt.s32.totalorder %s22, 0
          %s149 = scalar_select %p148, %s22, 0
          %s150 = smul.addr %s149, 4
          %s151 = scalar_lea.vmem %s1, %s150
        $region16: #{tpu_custom_call.1} parent=11 // pred_fallthru
          _
        // Predicated region
        $region17: #{tpu_custom_call.1} parent=11 // pred_check
          %p152 = pneg %p102
        $region18: #{tpu_custom_call.1} parent=11 // pred_check_branch
          %154 = sbr.rel (%p152) target = $region20
        $region19: #{tpu_custom_call.1} parent=11 // pred_region
          %p155 = scmp.lt.s32.totalorder %s22, 0
          %s156 = scalar_select %p155, %s22, 0
          %s157 = scalar_lea.vmem %s2, %s156
        $region20: #{tpu_custom_call.1} parent=11 // pred_fallthru
          _
      $region12: #{tpu_custom_call.1} parent=5 // pred_fallthru
        _
      %p158 = scmp.lt.s32.totalorder %s12, 2
      // Predicated region
      $region21: #{tpu_custom_call.1} parent=5 // pred_check
        %p159 = pneg %p158
      $region22: #{tpu_custom_call.1} parent=5 // pred_check_branch
        %161 = sbr.rel (%p159) target = $region24
      $region23: #{tpu_custom_call.1} parent=5 // pred_region
        // Predicated region
        $region25: #{tpu_custom_call.1} parent=23 // pred_check
          %p162 = pneg %p44
        $region26: #{tpu_custom_call.1} parent=23 // pred_check_branch
          %164 = sbr.rel (%p162) target = $region28
        $region27: #{tpu_custom_call.1} parent=23 // pred_region
          %s165 = smul.u32 128, %s19
          %p166 = scmp.lt.s32.totalorder %s165, 255
          %s167 = scalar_select %p166, %s165, 255
          %s168 = smul.addr %s167, 4
          %s169 = scalar_lea.vmem %s0, %s168
          %s170 = smul.u32 128, %s19
        $region28: #{tpu_custom_call.1} parent=23 // pred_fallthru
          _
      $region24: #{tpu_custom_call.1} parent=5 // pred_fallthru
        _
      %p171 = scmp.le.s32.totalorder 1, %s12
      %p172 = scmp.lt.s32.totalorder %s12, 3
      %p173 = pnand %p171, %p172
      %p174 = pneg %p173
      // Predicated region
      $region29: #{tpu_custom_call.1} parent=5 // pred_check
        _
      $region30: #{tpu_custom_call.1} parent=5 // pred_check_branch
        %176 = sbr.rel (%p173) target = $region32
      $region31: #{tpu_custom_call.1} parent=5 // pred_region
        %s177 = ssub.s32 %s12, 1
        %s178 = smul.u32 128, %s21
        %p179 = scmp.lt.s32.totalorder %s178, 255
        %s180 = scalar_select %p179, %s178, 255
        %s181 = smul.addr %s180, 4
        %s182 = scalar_lea.vmem %s0, %s181
        %p183 = pneg %p50
        %p184 = pneg %p47
        %p185 = scmp.lt.s32.totalorder %s22, 0
        %s186 = scalar_select %p185, %s22, 0
        %s187 = smul.addr %s186, 4
        %s188 = scalar_lea.vmem %s1, %s187
        %p189 = pneg %p76
        %p190 = pneg %p73
        %p191 = scmp.lt.s32.totalorder %s22, 0
        %s192 = scalar_select %p191, %s22, 0
        %s193 = scalar_lea.vmem %s2, %s192
        %p194 = pneg %p102
        %p195 = pneg %p99
        %p196 = pneg %p130
        %p197 = pneg %p127
        %s198 = sand.u32 %s117, 1
        %s199 = scalar_lea.sflag [#allocation3], %s198
        %s200 = sand.u32 %s117, 1
        %s201 = smul.addr %s200, 1024
        %s202 = scalar_lea.vmem [#allocation2], %s201
        %s203 = smul.u32 128, %s21
        %p204 = scmp.lt.s32.totalorder %s203, 255
        %s205 = scalar_select %p204, %s203, 255
        %s206 = smul.addr %s205, 4
        %s207 = scalar_lea.vmem %s0, %s206
        %s208 = smul.u32 128, %s21
        %p209 = scmp.lt.s32.totalorder %s22, 0
        %s210 = scalar_select %p209, %s22, 0
        %s211 = smul.addr %s210, 4
        %s212 = scalar_lea.vmem %s1, %s211
        %p213 = scmp.lt.s32.totalorder %s22, 0
        %s214 = scalar_select %p213, %s22, 0
        %s215 = scalar_lea.vmem %s2, %s214
        %s216 = smul.u32 128, %s21
        %v218 = vld [vmem:[%s207] sm:$0xf]
        %v219 = vld [vmem:[%s207 + $0x4] sm:$0xf]
        %v220 = vld [vmem:[%s207 + $0x8] sm:$0xf]
        %v221 = vld [vmem:[%s207 + $0xc] sm:$0xf]
        %v222 = vld [vmem:[%s207 + $0x10] sm:$0xf]
        %v223 = vld [vmem:[%s207 + $0x14] sm:$0xf]
        %v224 = vld [vmem:[%s207 + $0x18] sm:$0xf]
        %v225 = vld [vmem:[%s207 + $0x1c] sm:$0xf]
        %v226 = vld [vmem:[%s207 + $0x20] sm:$0xf]
        %v227 = vld [vmem:[%s207 + $0x24] sm:$0xf]
        %v228 = vld [vmem:[%s207 + $0x28] sm:$0xf]
        %v229 = vld [vmem:[%s207 + $0x2c] sm:$0xf]
        %v230 = vld [vmem:[%s207 + $0x30] sm:$0xf]
        %v231 = vld [vmem:[%s207 + $0x34] sm:$0xf]
        %v232 = vld [vmem:[%s207 + $0x38] sm:$0xf]
        %v233 = vld [vmem:[%s207 + $0x3c] sm:$0xf]
        %v234 = vld [vmem:[%s207 + $0x40] sm:$0xf]
        %v235 = vld [vmem:[%s207 + $0x44] sm:$0xf]
        %v236 = vld [vmem:[%s207 + $0x48] sm:$0xf]
        %v237 = vld [vmem:[%s207 + $0x4c] sm:$0xf]
        %v238 = vld [vmem:[%s207 + $0x50] sm:$0xf]
        %v239 = vld [vmem:[%s207 + $0x54] sm:$0xf]
        %v240 = vld [vmem:[%s207 + $0x58] sm:$0xf]
        %v241 = vld [vmem:[%s207 + $0x5c] sm:$0xf]
        %v242 = vld [vmem:[%s207 + $0x60] sm:$0xf]
        %v243 = vld [vmem:[%s207 + $0x64] sm:$0xf]
        %v244 = vld [vmem:[%s207 + $0x68] sm:$0xf]
        %v245 = vld [vmem:[%s207 + $0x6c] sm:$0xf]
        %v246 = vld [vmem:[%s207 + $0x70] sm:$0xf]
        %v247 = vld [vmem:[%s207 + $0x74] sm:$0xf]
        %v248 = vld [vmem:[%s207 + $0x78] sm:$0xf]
        %v249 = vld [vmem:[%s207 + $0x7c] sm:$0xf]
        %v250 = vld [vmem:[%s207 + $0x80] sm:$0xf]
        %v251 = vld [vmem:[%s207 + $0x84] sm:$0xf]
        %v252 = vld [vmem:[%s207 + $0x88] sm:$0xf]
        %v253 = vld [vmem:[%s207 + $0x8c] sm:$0xf]
        %v254 = vld [vmem:[%s207 + $0x90] sm:$0xf]
        %v255 = vld [vmem:[%s207 + $0x94] sm:$0xf]
        %v256 = vld [vmem:[%s207 + $0x98] sm:$0xf]
        %v257 = vld [vmem:[%s207 + $0x9c] sm:$0xf]
        %v258 = vld [vmem:[%s207 + $0xa0] sm:$0xf]
        %v259 = vld [vmem:[%s207 + $0xa4] sm:$0xf]
        %v260 = vld [vmem:[%s207 + $0xa8] sm:$0xf]
        %v261 = vld [vmem:[%s207 + $0xac] sm:$0xf]
        %v262 = vld [vmem:[%s207 + $0xb0] sm:$0xf]
        %v263 = vld [vmem:[%s207 + $0xb4] sm:$0xf]
        %v264 = vld [vmem:[%s207 + $0xb8] sm:$0xf]
        %v265 = vld [vmem:[%s207 + $0xbc] sm:$0xf]
        %v266 = vld [vmem:[%s207 + $0xc0] sm:$0xf]
        %v267 = vld [vmem:[%s207 + $0xc4] sm:$0xf]
        %v268 = vld [vmem:[%s207 + $0xc8] sm:$0xf]
        %v269 = vld [vmem:[%s207 + $0xcc] sm:$0xf]
        %v270 = vld [vmem:[%s207 + $0xd0] sm:$0xf]
        %v271 = vld [vmem:[%s207 + $0xd4] sm:$0xf]
        %v272 = vld [vmem:[%s207 + $0xd8] sm:$0xf]
        %v273 = vld [vmem:[%s207 + $0xdc] sm:$0xf]
        %v274 = vld [vmem:[%s207 + $0xe0] sm:$0xf]
        %v275 = vld [vmem:[%s207 + $0xe4] sm:$0xf]
        %v276 = vld [vmem:[%s207 + $0xe8] sm:$0xf]
        %v277 = vld [vmem:[%s207 + $0xec] sm:$0xf]
        %v278 = vld [vmem:[%s207 + $0xf0] sm:$0xf]
        %v279 = vld [vmem:[%s207 + $0xf4] sm:$0xf]
        %v280 = vld [vmem:[%s207 + $0xf8] sm:$0xf]
        %v281 = vld [vmem:[%s207 + $0xfc] sm:$0xf]
        %v282 = vld [vmem:[%s207 + $0x100] sm:$0xf]
        %v283 = vld [vmem:[%s207 + $0x104] sm:$0xf]
        %v284 = vld [vmem:[%s207 + $0x108] sm:$0xf]
        %v285 = vld [vmem:[%s207 + $0x10c] sm:$0xf]
        %v286 = vld [vmem:[%s207 + $0x110] sm:$0xf]
        %v287 = vld [vmem:[%s207 + $0x114] sm:$0xf]
        %v288 = vld [vmem:[%s207 + $0x118] sm:$0xf]
        %v289 = vld [vmem:[%s207 + $0x11c] sm:$0xf]
        %v290 = vld [vmem:[%s207 + $0x120] sm:$0xf]
        %v291 = vld [vmem:[%s207 + $0x124] sm:$0xf]
        %v292 = vld [vmem:[%s207 + $0x128] sm:$0xf]
        %v293 = vld [vmem:[%s207 + $0x12c] sm:$0xf]
        %v294 = vld [vmem:[%s207 + $0x130] sm:$0xf]
        %v295 = vld [vmem:[%s207 + $0x134] sm:$0xf]
        %v296 = vld [vmem:[%s207 + $0x138] sm:$0xf]
        %v297 = vld [vmem:[%s207 + $0x13c] sm:$0xf]
        %v298 = vld [vmem:[%s207 + $0x140] sm:$0xf]
        %v299 = vld [vmem:[%s207 + $0x144] sm:$0xf]
        %v300 = vld [vmem:[%s207 + $0x148] sm:$0xf]
        %v301 = vld [vmem:[%s207 + $0x14c] sm:$0xf]
        %v302 = vld [vmem:[%s207 + $0x150] sm:$0xf]
        %v303 = vld [vmem:[%s207 + $0x154] sm:$0xf]
        %v304 = vld [vmem:[%s207 + $0x158] sm:$0xf]
        %v305 = vld [vmem:[%s207 + $0x15c] sm:$0xf]
        %v306 = vld [vmem:[%s207 + $0x160] sm:$0xf]
        %v307 = vld [vmem:[%s207 + $0x164] sm:$0xf]
        %v308 = vld [vmem:[%s207 + $0x168] sm:$0xf]
        %v309 = vld [vmem:[%s207 + $0x16c] sm:$0xf]
        %v310 = vld [vmem:[%s207 + $0x170] sm:$0xf]
        %v311 = vld [vmem:[%s207 + $0x174] sm:$0xf]
        %v312 = vld [vmem:[%s207 + $0x178] sm:$0xf]
        %v313 = vld [vmem:[%s207 + $0x17c] sm:$0xf]
        %v314 = vld [vmem:[%s207 + $0x180] sm:$0xf]
        %v315 = vld [vmem:[%s207 + $0x184] sm:$0xf]
        %v316 = vld [vmem:[%s207 + $0x188] sm:$0xf]
        %v317 = vld [vmem:[%s207 + $0x18c] sm:$0xf]
        %v318 = vld [vmem:[%s207 + $0x190] sm:$0xf]
        %v319 = vld [vmem:[%s207 + $0x194] sm:$0xf]
        %v320 = vld [vmem:[%s207 + $0x198] sm:$0xf]
        %v321 = vld [vmem:[%s207 + $0x19c] sm:$0xf]
        %v322 = vld [vmem:[%s207 + $0x1a0] sm:$0xf]
        %v323 = vld [vmem:[%s207 + $0x1a4] sm:$0xf]
        %v324 = vld [vmem:[%s207 + $0x1a8] sm:$0xf]
        %v325 = vld [vmem:[%s207 + $0x1ac] sm:$0xf]
        %v326 = vld [vmem:[%s207 + $0x1b0] sm:$0xf]
        %v327 = vld [vmem:[%s207 + $0x1b4] sm:$0xf]
        %v328 = vld [vmem:[%s207 + $0x1b8] sm:$0xf]
        %v329 = vld [vmem:[%s207 + $0x1bc] sm:$0xf]
        %v330 = vld [vmem:[%s207 + $0x1c0] sm:$0xf]
        %v331 = vld [vmem:[%s207 + $0x1c4] sm:$0xf]
        %v332 = vld [vmem:[%s207 + $0x1c8] sm:$0xf]
        %v333 = vld [vmem:[%s207 + $0x1cc] sm:$0xf]
        %v334 = vld [vmem:[%s207 + $0x1d0] sm:$0xf]
        %v335 = vld [vmem:[%s207 + $0x1d4] sm:$0xf]
        %v336 = vld [vmem:[%s207 + $0x1d8] sm:$0xf]
        %v337 = vld [vmem:[%s207 + $0x1dc] sm:$0xf]
        %v338 = vld [vmem:[%s207 + $0x1e0] sm:$0xf]
        %v339 = vld [vmem:[%s207 + $0x1e4] sm:$0xf]
        %v340 = vld [vmem:[%s207 + $0x1e8] sm:$0xf]
        %v341 = vld [vmem:[%s207 + $0x1ec] sm:$0xf]
        %v342 = vld [vmem:[%s207 + $0x1f0] sm:$0xf]
        %v343 = vld [vmem:[%s207 + $0x1f4] sm:$0xf]
        %v344 = vld [vmem:[%s207 + $0x1f8] sm:$0xf]
        %v345 = vld [vmem:[%s207 + $0x1fc] sm:$0xf]
        %v346 = vld [vmem:[%s212] sm:$0xf]
        %v347 = vld [vmem:[%s212 + $0x4] sm:$0xf]
        %v348 = vld [vmem:[%s212 + $0x8] sm:$0xf]
        %v349 = vld [vmem:[%s212 + $0xc] sm:$0x3]
        %v350 = vld [vmem:[%s215] sm:$0x1]
        %v352 = vlaneseq
        %v353 = vshrl.u32 %v352, 7
        %v354 = vsub.s32 0, %v353
        %v355 = vrot.slane %v350, %v354
        %v485 = vunpack.c.l.b16 %v218
        %v486 = vunpack.c.l.b16 %v219
        %v487 = vunpack.c.l.b16 %v220
        %v488 = vunpack.c.l.b16 %v221
        %v489 = vunpack.c.l.b16 %v222
        %v490 = vunpack.c.l.b16 %v223
        %v491 = vunpack.c.l.b16 %v224
        %v492 = vunpack.c.l.b16 %v225
        %v493 = vunpack.c.l.b16 %v226
        %v494 = vunpack.c.l.b16 %v227
        %v495 = vunpack.c.l.b16 %v228
        %v496 = vunpack.c.l.b16 %v229
        %v497 = vunpack.c.l.b16 %v230
        %v498 = vunpack.c.l.b16 %v231
        %v499 = vunpack.c.l.b16 %v232
        %v500 = vunpack.c.l.b16 %v233
        %v501 = vunpack.c.l.b16 %v234
        %v502 = vunpack.c.l.b16 %v235
        %v503 = vunpack.c.l.b16 %v236
        %v504 = vunpack.c.l.b16 %v237
        %v505 = vunpack.c.l.b16 %v238
        %v506 = vunpack.c.l.b16 %v239
        %v507 = vunpack.c.l.b16 %v240
        %v508 = vunpack.c.l.b16 %v241
        %v509 = vunpack.c.l.b16 %v242
        %v510 = vunpack.c.l.b16 %v243
        %v511 = vunpack.c.l.b16 %v244
        %v512 = vunpack.c.l.b16 %v245
        %v513 = vunpack.c.l.b16 %v246
        %v514 = vunpack.c.l.b16 %v247
        %v515 = vunpack.c.l.b16 %v248
        %v516 = vunpack.c.l.b16 %v249
        %v517 = vunpack.c.l.b16 %v250
        %v518 = vunpack.c.l.b16 %v251
        %v519 = vunpack.c.l.b16 %v252
        %v520 = vunpack.c.l.b16 %v253
        %v521 = vunpack.c.l.b16 %v254
        %v522 = vunpack.c.l.b16 %v255
        %v523 = vunpack.c.l.b16 %v256
        %v524 = vunpack.c.l.b16 %v257
        %v525 = vunpack.c.l.b16 %v258
        %v526 = vunpack.c.l.b16 %v259
        %v527 = vunpack.c.l.b16 %v260
        %v528 = vunpack.c.l.b16 %v261
        %v529 = vunpack.c.l.b16 %v262
        %v530 = vunpack.c.l.b16 %v263
        %v531 = vunpack.c.l.b16 %v264
        %v532 = vunpack.c.l.b16 %v265
        %v533 = vunpack.c.l.b16 %v266
        %v534 = vunpack.c.l.b16 %v267
        %v535 = vunpack.c.l.b16 %v268
        %v536 = vunpack.c.l.b16 %v269
        %v537 = vunpack.c.l.b16 %v270
        %v538 = vunpack.c.l.b16 %v271
        %v539 = vunpack.c.l.b16 %v272
        %v540 = vunpack.c.l.b16 %v273
        %v541 = vunpack.c.l.b16 %v274
        %v542 = vunpack.c.l.b16 %v275
        %v543 = vunpack.c.l.b16 %v276
        %v544 = vunpack.c.l.b16 %v277
        %v545 = vunpack.c.l.b16 %v278
        %v546 = vunpack.c.l.b16 %v279
        %v547 = vunpack.c.l.b16 %v280
        %v548 = vunpack.c.l.b16 %v281
        %v549 = vunpack.c.l.b16 %v282
        %v550 = vunpack.c.l.b16 %v283
        %v551 = vunpack.c.l.b16 %v284
        %v552 = vunpack.c.l.b16 %v285
        %v553 = vunpack.c.l.b16 %v286
        %v554 = vunpack.c.l.b16 %v287
        %v555 = vunpack.c.l.b16 %v288
        %v556 = vunpack.c.l.b16 %v289
        %v557 = vunpack.c.l.b16 %v290
        %v558 = vunpack.c.l.b16 %v291
        %v559 = vunpack.c.l.b16 %v292
        %v560 = vunpack.c.l.b16 %v293
        %v561 = vunpack.c.l.b16 %v294
        %v562 = vunpack.c.l.b16 %v295
        %v563 = vunpack.c.l.b16 %v296
        %v564 = vunpack.c.l.b16 %v297
        %v565 = vunpack.c.l.b16 %v298
        %v566 = vunpack.c.l.b16 %v299
        %v567 = vunpack.c.l.b16 %v300
        %v568 = vunpack.c.l.b16 %v301
        %v569 = vunpack.c.l.b16 %v302
        %v570 = vunpack.c.l.b16 %v303
        %v571 = vunpack.c.l.b16 %v304
        %v572 = vunpack.c.l.b16 %v305
        %v573 = vunpack.c.l.b16 %v306
        %v574 = vunpack.c.l.b16 %v307
        %v575 = vunpack.c.l.b16 %v308
        %v576 = vunpack.c.l.b16 %v309
        %v577 = vunpack.c.l.b16 %v310
        %v578 = vunpack.c.l.b16 %v311
        %v579 = vunpack.c.l.b16 %v312
        %v580 = vunpack.c.l.b16 %v313
        %v581 = vunpack.c.l.b16 %v314
        %v582 = vunpack.c.l.b16 %v315
        %v583 = vunpack.c.l.b16 %v316
        %v584 = vunpack.c.l.b16 %v317
        %v585 = vunpack.c.l.b16 %v318
        %v586 = vunpack.c.l.b16 %v319
        %v587 = vunpack.c.l.b16 %v320
        %v588 = vunpack.c.l.b16 %v321
        %v589 = vunpack.c.l.b16 %v322
        %v590 = vunpack.c.l.b16 %v323
        %v591 = vunpack.c.l.b16 %v324
        %v592 = vunpack.c.l.b16 %v325
        %v593 = vunpack.c.l.b16 %v326
        %v594 = vunpack.c.l.b16 %v327
        %v595 = vunpack.c.l.b16 %v328
        %v596 = vunpack.c.l.b16 %v329
        %v597 = vunpack.c.l.b16 %v330
        %v598 = vunpack.c.l.b16 %v331
        %v599 = vunpack.c.l.b16 %v332
        %v600 = vunpack.c.l.b16 %v333
        %v601 = vunpack.c.l.b16 %v334
        %v602 = vunpack.c.l.b16 %v335
        %v603 = vunpack.c.l.b16 %v336
        %v604 = vunpack.c.l.b16 %v337
        %v605 = vunpack.c.l.b16 %v338
        %v606 = vunpack.c.l.b16 %v339
        %v607 = vunpack.c.l.b16 %v340
        %v608 = vunpack.c.l.b16 %v341
        %v609 = vunpack.c.l.b16 %v342
        %v610 = vunpack.c.l.b16 %v343
        %v611 = vunpack.c.l.b16 %v344
        %v612 = vunpack.c.l.b16 %v345
        %v613 = vpack.c.b16 %v486, %v485
        %v614 = vpack.c.b16 %v488, %v487
        %v615 = vpack.c.b16 %v490, %v489
        %v616 = vpack.c.b16 %v492, %v491
        %v617 = vpack.c.b16 %v494, %v493
        %v618 = vpack.c.b16 %v496, %v495
        %v619 = vpack.c.b16 %v498, %v497
        %v620 = vpack.c.b16 %v500, %v499
        %v621 = vpack.c.b16 %v502, %v501
        %v622 = vpack.c.b16 %v504, %v503
        %v623 = vpack.c.b16 %v506, %v505
        %v624 = vpack.c.b16 %v508, %v507
        %v625 = vpack.c.b16 %v510, %v509
        %v626 = vpack.c.b16 %v512, %v511
        %v627 = vpack.c.b16 %v514, %v513
        %v628 = vpack.c.b16 %v516, %v515
        %v629 = vpack.c.b16 %v518, %v517
        %v630 = vpack.c.b16 %v520, %v519
        %v631 = vpack.c.b16 %v522, %v521
        %v632 = vpack.c.b16 %v524, %v523
        %v633 = vpack.c.b16 %v526, %v525
        %v634 = vpack.c.b16 %v528, %v527
        %v635 = vpack.c.b16 %v530, %v529
        %v636 = vpack.c.b16 %v532, %v531
        %v637 = vpack.c.b16 %v534, %v533
        %v638 = vpack.c.b16 %v536, %v535
        %v639 = vpack.c.b16 %v538, %v537
        %v640 = vpack.c.b16 %v540, %v539
        %v641 = vpack.c.b16 %v542, %v541
        %v642 = vpack.c.b16 %v544, %v543
        %v643 = vpack.c.b16 %v546, %v545
        %v644 = vpack.c.b16 %v548, %v547
        %v645 = vpack.c.b16 %v550, %v549
        %v646 = vpack.c.b16 %v552, %v551
        %v647 = vpack.c.b16 %v554, %v553
        %v648 = vpack.c.b16 %v556, %v555
        %v649 = vpack.c.b16 %v558, %v557
        %v650 = vpack.c.b16 %v560, %v559
        %v651 = vpack.c.b16 %v562, %v561
        %v652 = vpack.c.b16 %v564, %v563
        %v653 = vpack.c.b16 %v566, %v565
        %v654 = vpack.c.b16 %v568, %v567
        %v655 = vpack.c.b16 %v570, %v569
        %v656 = vpack.c.b16 %v572, %v571
        %v657 = vpack.c.b16 %v574, %v573
        %v658 = vpack.c.b16 %v576, %v575
        %v659 = vpack.c.b16 %v578, %v577
        %v660 = vpack.c.b16 %v580, %v579
        %v661 = vpack.c.b16 %v582, %v581
        %v662 = vpack.c.b16 %v584, %v583
        %v663 = vpack.c.b16 %v586, %v585
        %v664 = vpack.c.b16 %v588, %v587
        %v665 = vpack.c.b16 %v590, %v589
        %v666 = vpack.c.b16 %v592, %v591
        %v667 = vpack.c.b16 %v594, %v593
        %v668 = vpack.c.b16 %v596, %v595
        %v669 = vpack.c.b16 %v598, %v597
        %v670 = vpack.c.b16 %v600, %v599
        %v671 = vpack.c.b16 %v602, %v601
        %v672 = vpack.c.b16 %v604, %v603
        %v673 = vpack.c.b16 %v606, %v605
        %v674 = vpack.c.b16 %v608, %v607
        %v675 = vpack.c.b16 %v610, %v609
        %v676 = vpack.c.b16 %v612, %v611
        %v681 = vunpack.c.l.b16 %v346
        %v682 = vunpack.c.l.b16 %v347
        %v683 = vunpack.c.l.b16 %v348
        %v684 = vunpack.c.l.b16 %v349
        %v685 = vpack.c.b16 %v682, %v681
        %v686 = vpack.c.b16 %v684, %v683
        %vm688 = vcmask 220160
        %v690 = vsel %vm688, %v613, 0
        %v693 = vsel %vm688, %v614, 0
        %v696 = vsel %vm688, %v615, 0
        %v699 = vsel %vm688, %v616, 0
        %v702 = vsel %vm688, %v617, 0
        %v705 = vsel %vm688, %v618, 0
        %v708 = vsel %vm688, %v619, 0
        %v711 = vsel %vm688, %v620, 0
        %v714 = vsel %vm688, %v621, 0
        %v717 = vsel %vm688, %v622, 0
        %v720 = vsel %vm688, %v623, 0
        %v723 = vsel %vm688, %v624, 0
        %v726 = vsel %vm688, %v625, 0
        %v729 = vsel %vm688, %v626, 0
        %v732 = vsel %vm688, %v627, 0
        %v735 = vsel %vm688, %v628, 0
        %v738 = vsel %vm688, %v629, 0
        %v741 = vsel %vm688, %v630, 0
        %v744 = vsel %vm688, %v631, 0
        %v747 = vsel %vm688, %v632, 0
        %v750 = vsel %vm688, %v633, 0
        %v753 = vsel %vm688, %v634, 0
        %v756 = vsel %vm688, %v635, 0
        %v759 = vsel %vm688, %v636, 0
        %v762 = vsel %vm688, %v637, 0
        %v765 = vsel %vm688, %v638, 0
        %v768 = vsel %vm688, %v639, 0
        %v771 = vsel %vm688, %v640, 0
        %v774 = vsel %vm688, %v641, 0
        %v777 = vsel %vm688, %v642, 0
        %v780 = vsel %vm688, %v643, 0
        %v783 = vsel %vm688, %v644, 0
        %v786 = vsel %vm688, %v645, 0
        %v789 = vsel %vm688, %v646, 0
        %v792 = vsel %vm688, %v647, 0
        %v795 = vsel %vm688, %v648, 0
        %v798 = vsel %vm688, %v649, 0
        %v801 = vsel %vm688, %v650, 0
        %v804 = vsel %vm688, %v651, 0
        %v807 = vsel %vm688, %v652, 0
        %v810 = vsel %vm688, %v653, 0
        %v813 = vsel %vm688, %v654, 0
        %v816 = vsel %vm688, %v655, 0
        %v819 = vsel %vm688, %v656, 0
        %v822 = vsel %vm688, %v657, 0
        %v825 = vsel %vm688, %v658, 0
        %v828 = vsel %vm688, %v659, 0
        %v831 = vsel %vm688, %v660, 0
        %v834 = vsel %vm688, %v661, 0
        %v837 = vsel %vm688, %v662, 0
        %v840 = vsel %vm688, %v663, 0
        %v843 = vsel %vm688, %v664, 0
        %v846 = vsel %vm688, %v665, 0
        %v849 = vsel %vm688, %v666, 0
        %v852 = vsel %vm688, %v667, 0
        %v855 = vsel %vm688, %v668, 0
        %v858 = vsel %vm688, %v669, 0
        %v861 = vsel %vm688, %v670, 0
        %v864 = vsel %vm688, %v671, 0
        %v867 = vsel %vm688, %v672, 0
        %v870 = vsel %vm688, %v673, 0
        %v873 = vsel %vm688, %v674, 0
        %v876 = vsel %vm688, %v675, 0
        %v879 = vsel %vm688, %v676, 0
        %vm881 = vcmask 1044480
        %vm882 = vcmask 1045504
        %v883 = vsel %vm881, 4294967295, 65535
        %v884 = vsel %vm882, %v883, 0
        %v886 = vand.u32 %v686, %v884
        %888 = vmatprep.subr.bf16.mxu0 0
        %889 = vmatpush1.bf16.msra.mxu0 %v685
        %890 = vmatprep.subr.bf16.mxu0 0
        %891 = vmatpush1.bf16.msra.mxu0 %v886
        %892 = vmatprep.subr.bf16.mxu0 0
        %893 = vmatpush1.bf16.msra.mxu0 0
        %894 = vmatprep.subr.bf16.mxu0 0
        %895 = vmatpush1.bf16.msra.mxu0 0
        %896 = vmatprep.subr.bf16.mxu0 0
        %897 = vmatpush1.bf16.msra.mxu0 0
        %898 = vmatprep.subr.bf16.mxu0 0
        %899 = vmatpush1.bf16.msra.mxu0 0
        %900 = vmatprep.subr.bf16.mxu0 0
        %901 = vmatpush1.bf16.msra.mxu0 0
        %902 = vmatprep.subr.bf16.mxu0 0
        %903 = vmatpush1.bf16.msra.mxu0 0
        %904 = vmatprep.subr.bf16.mxu0 0
        %905 = vmatpush1.bf16.msra.mxu0 0
        %906 = vmatprep.subr.bf16.mxu0 0
        %907 = vmatpush1.bf16.msra.mxu0 0
        %908 = vmatprep.subr.bf16.mxu0 0
        %909 = vmatpush1.bf16.msra.mxu0 0
        %910 = vmatprep.subr.bf16.mxu0 0
        %911 = vmatpush1.bf16.msra.mxu0 0
        %912 = vmatprep.subr.bf16.mxu0 0
        %913 = vmatpush1.bf16.msra.mxu0 0
        %914 = vmatprep.subr.bf16.mxu0 0
        %915 = vmatpush1.bf16.msra.mxu0 0
        %916 = vmatprep.subr.bf16.mxu0 0
        %917 = vmatpush1.bf16.msra.mxu0 0
        %918 = vmatprep.subr.bf16.mxu0 0
        %919 = vmatpush1.bf16.msra.mxu0 0
        %920 = vmatprep.mubr.bf16.mxu0 0
        %921 = vmatmul.mubr.bf16.gmra.mrb[0].mxu0 %v690
        %v922 = vpop.f32.mrb[0].mxu0
        %v923 = vadd.f32 %v355, %v922
        %v924 = vpop.f32.mrb[0].mxu0
        %v925 = vpop.f32.mrb[0].mxu0
        %v926 = vadd.f32 %v355, %v925
        %v927 = vpop.f32.mrb[0].mxu0
        %928 = vmatprep.mubr.bf16.mxu0 0
        %929 = vmatmul.mubr.bf16.gmra.mrb[0].mxu0 %v693
        %v930 = vpop.f32.mrb[0].mxu0
        %v931 = vadd.f32 %v355, %v930
        %v932 = vpop.f32.mrb[0].mxu0
        %v933 = vpop.f32.mrb[0].mxu0
        %v934 = vadd.f32 %v355, %v933
        %v935 = vpop.f32.mrb[0].mxu0
        %936 = vmatprep.mubr.bf16.mxu0 0
        %937 = vmatmul.mubr.bf16.gmra.mrb[0].mxu0 %v696
        %v938 = vpop.f32.mrb[0].mxu0
        %v939 = vadd.f32 %v355, %v938
        %v940 = vpop.f32.mrb[0].mxu0
        %v941 = vpop.f32.mrb[0].mxu0
        %v942 = vadd.f32 %v355, %v941
        %v943 = vpop.f32.mrb[0].mxu0
        %944 = vmatprep.mubr.bf16.mxu0 0
        %945 = vmatmul.mubr.bf16.gmra.mrb[0].mxu0 %v699
        %v946 = vpop.f32.mrb[0].mxu0
        %v947 = vadd.f32 %v355, %v946
        %v948 = vpop.f32.mrb[0].mxu0
        %v949 = vpop.f32.mrb[0].mxu0
        %v950 = vadd.f32 %v355, %v949
        %v951 = vpop.f32.mrb[0].mxu0
        %952 = vmatprep.mubr.bf16.mxu0 0
        %953 = vmatmul.mubr.bf16.gmra.mrb[0].mxu0 %v702
        %v954 = vpop.f32.mrb[0].mxu0
        %v955 = vadd.f32 %v355, %v954
        %v956 = vpop.f32.mrb[0].mxu0
        %v957 = vpop.f32.mrb[0].mxu0
        %v958 = vadd.f32 %v355, %v957
        %v959 = vpop.f32.mrb[0].mxu0
        %960 = vmatprep.mubr.bf16.mxu0 0
        %961 = vmatmul.mubr.bf16.gmra.mrb[0].mxu0 %v705
        %v962 = vpop.f32.mrb[0].mxu0
        %v963 = vadd.f32 %v355, %v962
        %v964 = vpop.f32.mrb[0].mxu0
        %v965 = vpop.f32.mrb[0].mxu0
        %v966 = vadd.f32 %v355, %v965
        %v967 = vpop.f32.mrb[0].mxu0
        %968 = vmatprep.mubr.bf16.mxu0 0
        %969 = vmatmul.mubr.bf16.gmra.mrb[0].mxu0 %v708
        %v970 = vpop.f32.mrb[0].mxu0
        %v971 = vadd.f32 %v355, %v970
        %v972 = vpop.f32.mrb[0].mxu0
        %v973 = vpop.f32.mrb[0].mxu0
        %v974 = vadd.f32 %v355, %v973
        %v975 = vpop.f32.mrb[0].mxu0
        %976 = vmatprep.mubr.bf16.mxu0 0
        %977 = vmatmul.mubr.bf16.gmra.mrb[0].mxu0 %v711
        %v978 = vpop.f32.mrb[0].mxu0
        %v979 = vadd.f32 %v355, %v978
        %v980 = vpop.f32.mrb[0].mxu0
        %v981 = vpop.f32.mrb[0].mxu0
        %v982 = vadd.f32 %v355, %v981
        %v983 = vpop.f32.mrb[0].mxu0
        %984 = vmatprep.mubr.bf16.mxu0 0
        %985 = vmatmul.mubr.bf16.gmra.mrb[0].mxu0 %v714
        %v986 = vpop.f32.mrb[0].mxu0
        %v987 = vadd.f32 %v355, %v986
        %v988 = vpop.f32.mrb[0].mxu0
        %v989 = vpop.f32.mrb[0].mxu0
        %v990 = vadd.f32 %v355, %v989
        %v991 = vpop.f32.mrb[0].mxu0
        %992 = vmatprep.mubr.bf16.mxu0 0
        %993 = vmatmul.mubr.bf16.gmra.mrb[0].mxu0 %v717
        %v994 = vpop.f32.mrb[0].mxu0
        %v995 = vadd.f32 %v355, %v994
        %v996 = vpop.f32.mrb[0].mxu0
        %v997 = vpop.f32.mrb[0].mxu0
        %v998 = vadd.f32 %v355, %v997
        %v999 = vpop.f32.mrb[0].mxu0
        %1000 = vmatprep.mubr.bf16.mxu0 0
        %1001 = vmatmul.mubr.bf16.gmra.mrb[0].mxu0 %v720
        %v1002 = vpop.f32.mrb[0].mxu0
        %v1003 = vadd.f32 %v355, %v1002
        %v1004 = vpop.f32.mrb[0].mxu0
        %v1005 = vpop.f32.mrb[0].mxu0
        %v1006 = vadd.f32 %v355, %v1005
        %v1007 = vpop.f32.mrb[0].mxu0
        %1008 = vmatprep.mubr.bf16.mxu0 0
        %1009 = vmatmul.mubr.bf16.gmra.mrb[0].mxu0 %v723
        %v1010 = vpop.f32.mrb[0].mxu0
        %v1011 = vadd.f32 %v355, %v1010
        %v1012 = vpop.f32.mrb[0].mxu0
        %v1013 = vpop.f32.mrb[0].mxu0
        %v1014 = vadd.f32 %v355, %v1013
        %v1015 = vpop.f32.mrb[0].mxu0
        %1016 = vmatprep.mubr.bf16.mxu0 0
        %1017 = vmatmul.mubr.bf16.gmra.mrb[0].mxu0 %v726
        %v1018 = vpop.f32.mrb[0].mxu0
        %v1019 = vadd.f32 %v355, %v1018
        %v1020 = vpop.f32.mrb[0].mxu0
        %v1021 = vpop.f32.mrb[0].mxu0
        %v1022 = vadd.f32 %v355, %v1021
        %v1023 = vpop.f32.mrb[0].mxu0
        %1024 = vmatprep.mubr.bf16.mxu0 0
        %1025 = vmatmul.mubr.bf16.gmra.mrb[0].mxu0 %v729
        %v1026 = vpop.f32.mrb[0].mxu0
        %v1027 = vadd.f32 %v355, %v1026
        %v1028 = vpop.f32.mrb[0].mxu0
        %v1029 = vpop.f32.mrb[0].mxu0
        %v1030 = vadd.f32 %v355, %v1029
        %v1031 = vpop.f32.mrb[0].mxu0
        %1032 = vmatprep.mubr.bf16.mxu0 0
        %1033 = vmatmul.mubr.bf16.gmra.mrb[0].mxu0 %v732
        %v1034 = vpop.f32.mrb[0].mxu0
        %v1035 = vadd.f32 %v355, %v1034
        %v1036 = vpop.f32.mrb[0].mxu0
        %v1037 = vpop.f32.mrb[0].mxu0
        %v1038 = vadd.f32 %v355, %v1037
        %v1039 = vpop.f32.mrb[0].mxu0
        %1040 = vmatprep.mubr.bf16.mxu0 0
        %1041 = vmatmul.mubr.bf16.gmra.mrb[0].mxu0 %v735
        %v1042 = vpop.f32.mrb[0].mxu0
        %v1043 = vadd.f32 %v355, %v1042
        %v1044 = vpop.f32.mrb[0].mxu0
        %v1045 = vpop.f32.mrb[0].mxu0
        %v1046 = vadd.f32 %v355, %v1045
        %v1047 = vpop.f32.mrb[0].mxu0
        %1048 = vmatprep.mubr.bf16.mxu0 0
        %1049 = vmatmul.mubr.bf16.gmra.mrb[0].mxu0 %v738
        %v1050 = vpop.f32.mrb[0].mxu0
        %v1051 = vadd.f32 %v355, %v1050
        %v1052 = vpop.f32.mrb[0].mxu0
        %v1053 = vpop.f32.mrb[0].mxu0
        %v1054 = vadd.f32 %v355, %v1053
        %v1055 = vpop.f32.mrb[0].mxu0
        %1056 = vmatprep.mubr.bf16.mxu0 0
        %1057 = vmatmul.mubr.bf16.gmra.mrb[0].mxu0 %v741
        %v1058 = vpop.f32.mrb[0].mxu0
        %v1059 = vadd.f32 %v355, %v1058
        %v1060 = vpop.f32.mrb[0].mxu0
        %v1061 = vpop.f32.mrb[0].mxu0
        %v1062 = vadd.f32 %v355, %v1061
        %v1063 = vpop.f32.mrb[0].mxu0
        %1064 = vmatprep.mubr.bf16.mxu0 0
        %1065 = vmatmul.mubr.bf16.gmra.mrb[0].mxu0 %v744
        %v1066 = vpop.f32.mrb[0].mxu0
        %v1067 = vadd.f32 %v355, %v1066
        %v1068 = vpop.f32.mrb[0].mxu0
        %v1069 = vpop.f32.mrb[0].mxu0
        %v1070 = vadd.f32 %v355, %v1069
        %v1071 = vpop.f32.mrb[0].mxu0
        %1072 = vmatprep.mubr.bf16.mxu0 0
        %1073 = vmatmul.mubr.bf16.gmra.mrb[0].mxu0 %v747
        %v1074 = vpop.f32.mrb[0].mxu0
        %v1075 = vadd.f32 %v355, %v1074
        %v1076 = vpop.f32.mrb[0].mxu0
        %v1077 = vpop.f32.mrb[0].mxu0
        %v1078 = vadd.f32 %v355, %v1077
        %v1079 = vpop.f32.mrb[0].mxu0
        %1080 = vmatprep.mubr.bf16.mxu0 0
        %1081 = vmatmul.mubr.bf16.gmra.mrb[0].mxu0 %v750
        %v1082 = vpop.f32.mrb[0].mxu0
        %v1083 = vadd.f32 %v355, %v1082
        %v1084 = vpop.f32.mrb[0].mxu0
        %v1085 = vpop.f32.mrb[0].mxu0
        %v1086 = vadd.f32 %v355, %v1085
        %v1087 = vpop.f32.mrb[0].mxu0
        %1088 = vmatprep.mubr.bf16.mxu0 0
        %1089 = vmatmul.mubr.bf16.gmra.mrb[0].mxu0 %v753
        %v1090 = vpop.f32.mrb[0].mxu0
        %v1091 = vadd.f32 %v355, %v1090
        %v1092 = vpop.f32.mrb[0].mxu0
        %v1093 = vpop.f32.mrb[0].mxu0
        %v1094 = vadd.f32 %v355, %v1093
        %v1095 = vpop.f32.mrb[0].mxu0
        %1096 = vmatprep.mubr.bf16.mxu0 0
        %1097 = vmatmul.mubr.bf16.gmra.mrb[0].mxu0 %v756
        %v1098 = vpop.f32.mrb[0].mxu0
        %v1099 = vadd.f32 %v355, %v1098
        %v1100 = vpop.f32.mrb[0].mxu0
        %v1101 = vpop.f32.mrb[0].mxu0
        %v1102 = vadd.f32 %v355, %v1101
        %v1103 = vpop.f32.mrb[0].mxu0
        %1104 = vmatprep.mubr.bf16.mxu0 0
        %1105 = vmatmul.mubr.bf16.gmra.mrb[0].mxu0 %v759
        %v1106 = vpop.f32.mrb[0].mxu0
        %v1107 = vadd.f32 %v355, %v1106
        %v1108 = vpop.f32.mrb[0].mxu0
        %v1109 = vpop.f32.mrb[0].mxu0
        %v1110 = vadd.f32 %v355, %v1109
        %v1111 = vpop.f32.mrb[0].mxu0
        %1112 = vmatprep.mubr.bf16.mxu0 0
        %1113 = vmatmul.mubr.bf16.gmra.mrb[0].mxu0 %v762
        %v1114 = vpop.f32.mrb[0].mxu0
        %v1115 = vadd.f32 %v355, %v1114
        %v1116 = vpop.f32.mrb[0].mxu0
        %v1117 = vpop.f32.mrb[0].mxu0
        %v1118 = vadd.f32 %v355, %v1117
        %v1119 = vpop.f32.mrb[0].mxu0
        %1120 = vmatprep.mubr.bf16.mxu0 0
        %1121 = vmatmul.mubr.bf16.gmra.mrb[0].mxu0 %v765
        %v1122 = vpop.f32.mrb[0].mxu0
        %v1123 = vadd.f32 %v355, %v1122
        %v1124 = vpop.f32.mrb[0].mxu0
        %v1125 = vpop.f32.mrb[0].mxu0
        %v1126 = vadd.f32 %v355, %v1125
        %v1127 = vpop.f32.mrb[0].mxu0
        %1128 = vmatprep.mubr.bf16.mxu0 0
        %1129 = vmatmul.mubr.bf16.gmra.mrb[0].mxu0 %v768
        %v1130 = vpop.f32.mrb[0].mxu0
        %v1131 = vadd.f32 %v355, %v1130
        %v1132 = vpop.f32.mrb[0].mxu0
        %v1133 = vpop.f32.mrb[0].mxu0
        %v1134 = vadd.f32 %v355, %v1133
        %v1135 = vpop.f32.mrb[0].mxu0
        %1136 = vmatprep.mubr.bf16.mxu0 0
        %1137 = vmatmul.mubr.bf16.gmra.mrb[0].mxu0 %v771
        %v1138 = vpop.f32.mrb[0].mxu0
        %v1139 = vadd.f32 %v355, %v1138
        %v1140 = vpop.f32.mrb[0].mxu0
        %v1141 = vpop.f32.mrb[0].mxu0
        %v1142 = vadd.f32 %v355, %v1141
        %v1143 = vpop.f32.mrb[0].mxu0
        %1144 = vmatprep.mubr.bf16.mxu0 0
        %1145 = vmatmul.mubr.bf16.gmra.mrb[0].mxu0 %v774
        %v1146 = vpop.f32.mrb[0].mxu0
        %v1147 = vadd.f32 %v355, %v1146
        %v1148 = vpop.f32.mrb[0].mxu0
        %v1149 = vpop.f32.mrb[0].mxu0
        %v1150 = vadd.f32 %v355, %v1149
        %v1151 = vpop.f32.mrb[0].mxu0
        %1152 = vmatprep.mubr.bf16.mxu0 0
        %1153 = vmatmul.mubr.bf16.gmra.mrb[0].mxu0 %v777
        %v1154 = vpop.f32.mrb[0].mxu0
        %v1155 = vadd.f32 %v355, %v1154
        %v1156 = vpop.f32.mrb[0].mxu0
        %v1157 = vpop.f32.mrb[0].mxu0
        %v1158 = vadd.f32 %v355, %v1157
        %v1159 = vpop.f32.mrb[0].mxu0
        %1160 = vmatprep.mubr.bf16.mxu0 0
        %1161 = vmatmul.mubr.bf16.gmra.mrb[0].mxu0 %v780
        %v1162 = vpop.f32.mrb[0].mxu0
        %v1163 = vadd.f32 %v355, %v1162
        %v1164 = vpop.f32.mrb[0].mxu0
        %v1165 = vpop.f32.mrb[0].mxu0
        %v1166 = vadd.f32 %v355, %v1165
        %v1167 = vpop.f32.mrb[0].mxu0
        %1168 = vmatprep.mubr.bf16.mxu0 0
        %1169 = vmatmul.mubr.bf16.gmra.mrb[0].mxu0 %v783
        %v1170 = vpop.f32.mrb[0].mxu0
        %v1171 = vadd.f32 %v355, %v1170
        %v1172 = vpop.f32.mrb[0].mxu0
        %v1173 = vpop.f32.mrb[0].mxu0
        %v1174 = vadd.f32 %v355, %v1173
        %v1175 = vpop.f32.mrb[0].mxu0
        %1176 = vmatprep.mubr.bf16.mxu0 0
        %1177 = vmatmul.mubr.bf16.gmra.mrb[0].mxu0 %v786
        %v1178 = vpop.f32.mrb[0].mxu0
        %v1179 = vadd.f32 %v355, %v1178
        %v1180 = vpop.f32.mrb[0].mxu0
        %v1181 = vpop.f32.mrb[0].mxu0
        %v1182 = vadd.f32 %v355, %v1181
        %v1183 = vpop.f32.mrb[0].mxu0
        %1184 = vmatprep.mubr.bf16.mxu0 0
        %1185 = vmatmul.mubr.bf16.gmra.mrb[0].mxu0 %v789
        %v1186 = vpop.f32.mrb[0].mxu0
        %v1187 = vadd.f32 %v355, %v1186
        %v1188 = vpop.f32.mrb[0].mxu0
        %v1189 = vpop.f32.mrb[0].mxu0
        %v1190 = vadd.f32 %v355, %v1189
        %v1191 = vpop.f32.mrb[0].mxu0
        %1192 = vmatprep.mubr.bf16.mxu0 0
        %1193 = vmatmul.mubr.bf16.gmra.mrb[0].mxu0 %v792
        %v1194 = vpop.f32.mrb[0].mxu0
        %v1195 = vadd.f32 %v355, %v1194
        %v1196 = vpop.f32.mrb[0].mxu0
        %v1197 = vpop.f32.mrb[0].mxu0
        %v1198 = vadd.f32 %v355, %v1197
        %v1199 = vpop.f32.mrb[0].mxu0
        %1200 = vmatprep.mubr.bf16.mxu0 0
        %1201 = vmatmul.mubr.bf16.gmra.mrb[0].mxu0 %v795
        %v1202 = vpop.f32.mrb[0].mxu0
        %v1203 = vadd.f32 %v355, %v1202
        %v1204 = vpop.f32.mrb[0].mxu0
        %v1205 = vpop.f32.mrb[0].mxu0
        %v1206 = vadd.f32 %v355, %v1205
        %v1207 = vpop.f32.mrb[0].mxu0
        %1208 = vmatprep.mubr.bf16.mxu0 0
        %1209 = vmatmul.mubr.bf16.gmra.mrb[0].mxu0 %v798
        %v1210 = vpop.f32.mrb[0].mxu0
        %v1211 = vadd.f32 %v355, %v1210
        %v1212 = vpop.f32.mrb[0].mxu0
        %v1213 = vpop.f32.mrb[0].mxu0
        %v1214 = vadd.f32 %v355, %v1213
        %v1215 = vpop.f32.mrb[0].mxu0
        %1216 = vmatprep.mubr.bf16.mxu0 0
        %1217 = vmatmul.mubr.bf16.gmra.mrb[0].mxu0 %v801
        %v1218 = vpop.f32.mrb[0].mxu0
        %v1219 = vadd.f32 %v355, %v1218
        %v1220 = vpop.f32.mrb[0].mxu0
        %v1221 = vpop.f32.mrb[0].mxu0
        %v1222 = vadd.f32 %v355, %v1221
        %v1223 = vpop.f32.mrb[0].mxu0
        %1224 = vmatprep.mubr.bf16.mxu0 0
        %1225 = vmatmul.mubr.bf16.gmra.mrb[0].mxu0 %v804
        %v1226 = vpop.f32.mrb[0].mxu0
        %v1227 = vadd.f32 %v355, %v1226
        %v1228 = vpop.f32.mrb[0].mxu0
        %v1229 = vpop.f32.mrb[0].mxu0
        %v1230 = vadd.f32 %v355, %v1229
        %v1231 = vpop.f32.mrb[0].mxu0
        %1232 = vmatprep.mubr.bf16.mxu0 0
        %1233 = vmatmul.mubr.bf16.gmra.mrb[0].mxu0 %v807
        %v1234 = vpop.f32.mrb[0].mxu0
        %v1235 = vadd.f32 %v355, %v1234
        %v1236 = vpop.f32.mrb[0].mxu0
        %v1237 = vpop.f32.mrb[0].mxu0
        %v1238 = vadd.f32 %v355, %v1237
        %v1239 = vpop.f32.mrb[0].mxu0
        %1240 = vmatprep.mubr.bf16.mxu0 0
        %1241 = vmatmul.mubr.bf16.gmra.mrb[0].mxu0 %v810
        %v1242 = vpop.f32.mrb[0].mxu0
        %v1243 = vadd.f32 %v355, %v1242
        %v1244 = vpop.f32.mrb[0].mxu0
        %v1245 = vpop.f32.mrb[0].mxu0
        %v1246 = vadd.f32 %v355, %v1245
        %v1247 = vpop.f32.mrb[0].mxu0
        %1248 = vmatprep.mubr.bf16.mxu0 0
        %1249 = vmatmul.mubr.bf16.gmra.mrb[0].mxu0 %v813
        %v1250 = vpop.f32.mrb[0].mxu0
        %v1251 = vadd.f32 %v355, %v1250
        %v1252 = vpop.f32.mrb[0].mxu0
        %v1253 = vpop.f32.mrb[0].mxu0
        %v1254 = vadd.f32 %v355, %v1253
        %v1255 = vpop.f32.mrb[0].mxu0
        %1256 = vmatprep.mubr.bf16.mxu0 0
        %1257 = vmatmul.mubr.bf16.gmra.mrb[0].mxu0 %v816
        %v1258 = vpop.f32.mrb[0].mxu0
        %v1259 = vadd.f32 %v355, %v1258
        %v1260 = vpop.f32.mrb[0].mxu0
        %v1261 = vpop.f32.mrb[0].mxu0
        %v1262 = vadd.f32 %v355, %v1261
        %v1263 = vpop.f32.mrb[0].mxu0
        %1264 = vmatprep.mubr.bf16.mxu0 0
        %1265 = vmatmul.mubr.bf16.gmra.mrb[0].mxu0 %v819
        %v1266 = vpop.f32.mrb[0].mxu0
        %v1267 = vadd.f32 %v355, %v1266
        %v1268 = vpop.f32.mrb[0].mxu0
        %v1269 = vpop.f32.mrb[0].mxu0
        %v1270 = vadd.f32 %v355, %v1269
        %v1271 = vpop.f32.mrb[0].mxu0
        %1272 = vmatprep.mubr.bf16.mxu0 0
        %1273 = vmatmul.mubr.bf16.gmra.mrb[0].mxu0 %v822
        %v1274 = vpop.f32.mrb[0].mxu0
        %v1275 = vadd.f32 %v355, %v1274
        %v1276 = vpop.f32.mrb[0].mxu0
        %v1277 = vpop.f32.mrb[0].mxu0
        %v1278 = vadd.f32 %v355, %v1277
        %v1279 = vpop.f32.mrb[0].mxu0
        %1280 = vmatprep.mubr.bf16.mxu0 0
        %1281 = vmatmul.mubr.bf16.gmra.mrb[0].mxu0 %v825
        %v1282 = vpop.f32.mrb[0].mxu0
        %v1283 = vadd.f32 %v355, %v1282
        %v1284 = vpop.f32.mrb[0].mxu0
        %v1285 = vpop.f32.mrb[0].mxu0
        %v1286 = vadd.f32 %v355, %v1285
        %v1287 = vpop.f32.mrb[0].mxu0
        %1288 = vmatprep.mubr.bf16.mxu0 0
        %1289 = vmatmul.mubr.bf16.gmra.mrb[0].mxu0 %v828
        %v1290 = vpop.f32.mrb[0].mxu0
        %v1291 = vadd.f32 %v355, %v1290
        %v1292 = vpop.f32.mrb[0].mxu0
        %v1293 = vpop.f32.mrb[0].mxu0
        %v1294 = vadd.f32 %v355, %v1293
        %v1295 = vpop.f32.mrb[0].mxu0
        %1296 = vmatprep.mubr.bf16.mxu0 0
        %1297 = vmatmul.mubr.bf16.gmra.mrb[0].mxu0 %v831
        %v1298 = vpop.f32.mrb[0].mxu0
        %v1299 = vadd.f32 %v355, %v1298
        %v1300 = vpop.f32.mrb[0].mxu0
        %v1301 = vpop.f32.mrb[0].mxu0
        %v1302 = vadd.f32 %v355, %v1301
        %v1303 = vpop.f32.mrb[0].mxu0
        %1304 = vmatprep.mubr.bf16.mxu0 0
        %1305 = vmatmul.mubr.bf16.gmra.mrb[0].mxu0 %v834
        %v1306 = vpop.f32.mrb[0].mxu0
        %v1307 = vadd.f32 %v355, %v1306
        %v1308 = vpop.f32.mrb[0].mxu0
        %v1309 = vpop.f32.mrb[0].mxu0
        %v1310 = vadd.f32 %v355, %v1309
        %v1311 = vpop.f32.mrb[0].mxu0
        %1312 = vmatprep.mubr.bf16.mxu0 0
        %1313 = vmatmul.mubr.bf16.gmra.mrb[0].mxu0 %v837
        %v1314 = vpop.f32.mrb[0].mxu0
        %v1315 = vadd.f32 %v355, %v1314
        %v1316 = vpop.f32.mrb[0].mxu0
        %v1317 = vpop.f32.mrb[0].mxu0
        %v1318 = vadd.f32 %v355, %v1317
        %v1319 = vpop.f32.mrb[0].mxu0
        %1320 = vmatprep.mubr.bf16.mxu0 0
        %1321 = vmatmul.mubr.bf16.gmra.mrb[0].mxu0 %v840
        %v1322 = vpop.f32.mrb[0].mxu0
        %v1323 = vadd.f32 %v355, %v1322
        %v1324 = vpop.f32.mrb[0].mxu0
        %v1325 = vpop.f32.mrb[0].mxu0
        %v1326 = vadd.f32 %v355, %v1325
        %v1327 = vpop.f32.mrb[0].mxu0
        %1328 = vmatprep.mubr.bf16.mxu0 0
        %1329 = vmatmul.mubr.bf16.gmra.mrb[0].mxu0 %v843
        %v1330 = vpop.f32.mrb[0].mxu0
        %v1331 = vadd.f32 %v355, %v1330
        %v1332 = vpop.f32.mrb[0].mxu0
        %v1333 = vpop.f32.mrb[0].mxu0
        %v1334 = vadd.f32 %v355, %v1333
        %v1335 = vpop.f32.mrb[0].mxu0
        %1336 = vmatprep.mubr.bf16.mxu0 0
        %1337 = vmatmul.mubr.bf16.gmra.mrb[0].mxu0 %v846
        %v1338 = vpop.f32.mrb[0].mxu0
        %v1339 = vadd.f32 %v355, %v1338
        %v1340 = vpop.f32.mrb[0].mxu0
        %v1341 = vpop.f32.mrb[0].mxu0
        %v1342 = vadd.f32 %v355, %v1341
        %v1343 = vpop.f32.mrb[0].mxu0
        %1344 = vmatprep.mubr.bf16.mxu0 0
        %1345 = vmatmul.mubr.bf16.gmra.mrb[0].mxu0 %v849
        %v1346 = vpop.f32.mrb[0].mxu0
        %v1347 = vadd.f32 %v355, %v1346
        %v1348 = vpop.f32.mrb[0].mxu0
        %v1349 = vpop.f32.mrb[0].mxu0
        %v1350 = vadd.f32 %v355, %v1349
        %v1351 = vpop.f32.mrb[0].mxu0
        %1352 = vmatprep.mubr.bf16.mxu0 0
        %1353 = vmatmul.mubr.bf16.gmra.mrb[0].mxu0 %v852
        %v1354 = vpop.f32.mrb[0].mxu0
        %v1355 = vadd.f32 %v355, %v1354
        %v1356 = vpop.f32.mrb[0].mxu0
        %v1357 = vpop.f32.mrb[0].mxu0
        %v1358 = vadd.f32 %v355, %v1357
        %v1359 = vpop.f32.mrb[0].mxu0
        %1360 = vmatprep.mubr.bf16.mxu0 0
        %1361 = vmatmul.mubr.bf16.gmra.mrb[0].mxu0 %v855
        %v1362 = vpop.f32.mrb[0].mxu0
        %v1363 = vadd.f32 %v355, %v1362
        %v1364 = vpop.f32.mrb[0].mxu0
        %v1365 = vpop.f32.mrb[0].mxu0
        %v1366 = vadd.f32 %v355, %v1365
        %v1367 = vpop.f32.mrb[0].mxu0
        %1368 = vmatprep.mubr.bf16.mxu0 0
        %1369 = vmatmul.mubr.bf16.gmra.mrb[0].mxu0 %v858
        %v1370 = vpop.f32.mrb[0].mxu0
        %v1371 = vadd.f32 %v355, %v1370
        %v1372 = vpop.f32.mrb[0].mxu0
        %v1373 = vpop.f32.mrb[0].mxu0
        %v1374 = vadd.f32 %v355, %v1373
        %v1375 = vpop.f32.mrb[0].mxu0
        %1376 = vmatprep.mubr.bf16.mxu0 0
        %1377 = vmatmul.mubr.bf16.gmra.mrb[0].mxu0 %v861
        %v1378 = vpop.f32.mrb[0].mxu0
        %v1379 = vadd.f32 %v355, %v1378
        %v1380 = vpop.f32.mrb[0].mxu0
        %v1381 = vpop.f32.mrb[0].mxu0
        %v1382 = vadd.f32 %v355, %v1381
        %v1383 = vpop.f32.mrb[0].mxu0
        %1384 = vmatprep.mubr.bf16.mxu0 0
        %1385 = vmatmul.mubr.bf16.gmra.mrb[0].mxu0 %v864
        %v1386 = vpop.f32.mrb[0].mxu0
        %v1387 = vadd.f32 %v355, %v1386
        %v1388 = vpop.f32.mrb[0].mxu0
        %v1389 = vpop.f32.mrb[0].mxu0
        %v1390 = vadd.f32 %v355, %v1389
        %v1391 = vpop.f32.mrb[0].mxu0
        %1392 = vmatprep.mubr.bf16.mxu0 0
        %1393 = vmatmul.mubr.bf16.gmra.mrb[0].mxu0 %v867
        %v1394 = vpop.f32.mrb[0].mxu0
        %v1395 = vadd.f32 %v355, %v1394
        %v1396 = vpop.f32.mrb[0].mxu0
        %v1397 = vpop.f32.mrb[0].mxu0
        %v1398 = vadd.f32 %v355, %v1397
        %v1399 = vpop.f32.mrb[0].mxu0
        %1400 = vmatprep.mubr.bf16.mxu0 0
        %1401 = vmatmul.mubr.bf16.gmra.mrb[0].mxu0 %v870
        %v1402 = vpop.f32.mrb[0].mxu0
        %v1403 = vadd.f32 %v355, %v1402
        %v1404 = vpop.f32.mrb[0].mxu0
        %v1405 = vpop.f32.mrb[0].mxu0
        %v1406 = vadd.f32 %v355, %v1405
        %v1407 = vpop.f32.mrb[0].mxu0
        %1408 = vmatprep.mubr.bf16.mxu0 0
        %1409 = vmatmul.mubr.bf16.gmra.mrb[0].mxu0 %v873
        %v1410 = vpop.f32.mrb[0].mxu0
        %v1411 = vadd.f32 %v355, %v1410
        %v1412 = vpop.f32.mrb[0].mxu0
        %v1413 = vpop.f32.mrb[0].mxu0
        %v1414 = vadd.f32 %v355, %v1413
        %v1415 = vpop.f32.mrb[0].mxu0
        %1416 = vmatprep.mubr.bf16.mxu0 0
        %1417 = vmatmul.mubr.bf16.gmra.mrb[0].mxu0 %v876
        %v1418 = vpop.f32.mrb[0].mxu0
        %v1419 = vadd.f32 %v355, %v1418
        %v1420 = vpop.f32.mrb[0].mxu0
        %v1421 = vpop.f32.mrb[0].mxu0
        %v1422 = vadd.f32 %v355, %v1421
        %v1423 = vpop.f32.mrb[0].mxu0
        %1424 = vmatprep.mubr.bf16.mxu0 0
        %1425 = vmatmul.mubr.bf16.gmra.mrb[0].mxu0 %v879
        %v1426 = vpop.f32.mrb[0].mxu0
        %v1427 = vadd.f32 %v355, %v1426
        %v1428 = vpop.f32.mrb[0].mxu0
        %v1429 = vpop.f32.mrb[0].mxu0
        %v1430 = vadd.f32 %v355, %v1429
        %v1431 = vpop.f32.mrb[0].mxu0
        %1432 = vdwg.mxu0
        %v1433 = vmax.f32 %v923, 0.0
        %v1434 = vmax.f32 %v926, 0.0
        %v1435 = vmax.f32 %v931, 0.0
        %v1436 = vmax.f32 %v934, 0.0
        %v1437 = vmax.f32 %v939, 0.0
        %v1438 = vmax.f32 %v942, 0.0
        %v1439 = vmax.f32 %v947, 0.0
        %v1440 = vmax.f32 %v950, 0.0
        %v1441 = vmax.f32 %v955, 0.0
        %v1442 = vmax.f32 %v958, 0.0
        %v1443 = vmax.f32 %v963, 0.0
        %v1444 = vmax.f32 %v966, 0.0
        %v1445 = vmax.f32 %v971, 0.0
        %v1446 = vmax.f32 %v974, 0.0
        %v1447 = vmax.f32 %v979, 0.0
        %v1448 = vmax.f32 %v982, 0.0
        %v1449 = vmax.f32 %v987, 0.0
        %v1450 = vmax.f32 %v990, 0.0
        %v1451 = vmax.f32 %v995, 0.0
        %v1452 = vmax.f32 %v998, 0.0
        %v1453 = vmax.f32 %v1003, 0.0
        %v1454 = vmax.f32 %v1006, 0.0
        %v1455 = vmax.f32 %v1011, 0.0
        %v1456 = vmax.f32 %v1014, 0.0
        %v1457 = vmax.f32 %v1019, 0.0
        %v1458 = vmax.f32 %v1022, 0.0
        %v1459 = vmax.f32 %v1027, 0.0
        %v1460 = vmax.f32 %v1030, 0.0
        %v1461 = vmax.f32 %v1035, 0.0
        %v1462 = vmax.f32 %v1038, 0.0
        %v1463 = vmax.f32 %v1043, 0.0
        %v1464 = vmax.f32 %v1046, 0.0
        %v1465 = vmax.f32 %v1051, 0.0
        %v1466 = vmax.f32 %v1054, 0.0
        %v1467 = vmax.f32 %v1059, 0.0
        %v1468 = vmax.f32 %v1062, 0.0
        %v1469 = vmax.f32 %v1067, 0.0
        %v1470 = vmax.f32 %v1070, 0.0
        %v1471 = vmax.f32 %v1075, 0.0
        %v1472 = vmax.f32 %v1078, 0.0
        %v1473 = vmax.f32 %v1083, 0.0
        %v1474 = vmax.f32 %v1086, 0.0
        %v1475 = vmax.f32 %v1091, 0.0
        %v1476 = vmax.f32 %v1094, 0.0
        %v1477 = vmax.f32 %v1099, 0.0
        %v1478 = vmax.f32 %v1102, 0.0
        %v1479 = vmax.f32 %v1107, 0.0
        %v1480 = vmax.f32 %v1110, 0.0
        %v1481 = vmax.f32 %v1115, 0.0
        %v1482 = vmax.f32 %v1118, 0.0
        %v1483 = vmax.f32 %v1123, 0.0
        %v1484 = vmax.f32 %v1126, 0.0
        %v1485 = vmax.f32 %v1131, 0.0
        %v1486 = vmax.f32 %v1134, 0.0
        %v1487 = vmax.f32 %v1139, 0.0
        %v1488 = vmax.f32 %v1142, 0.0
        %v1489 = vmax.f32 %v1147, 0.0
        %v1490 = vmax.f32 %v1150, 0.0
        %v1491 = vmax.f32 %v1155, 0.0
        %v1492 = vmax.f32 %v1158, 0.0
        %v1493 = vmax.f32 %v1163, 0.0
        %v1494 = vmax.f32 %v1166, 0.0
        %v1495 = vmax.f32 %v1171, 0.0
        %v1496 = vmax.f32 %v1174, 0.0
        %v1497 = vmax.f32 %v1179, 0.0
        %v1498 = vmax.f32 %v1182, 0.0
        %v1499 = vmax.f32 %v1187, 0.0
        %v1500 = vmax.f32 %v1190, 0.0
        %v1501 = vmax.f32 %v1195, 0.0
        %v1502 = vmax.f32 %v1198, 0.0
        %v1503 = vmax.f32 %v1203, 0.0
        %v1504 = vmax.f32 %v1206, 0.0
        %v1505 = vmax.f32 %v1211, 0.0
        %v1506 = vmax.f32 %v1214, 0.0
        %v1507 = vmax.f32 %v1219, 0.0
        %v1508 = vmax.f32 %v1222, 0.0
        %v1509 = vmax.f32 %v1227, 0.0
        %v1510 = vmax.f32 %v1230, 0.0
        %v1511 = vmax.f32 %v1235, 0.0
        %v1512 = vmax.f32 %v1238, 0.0
        %v1513 = vmax.f32 %v1243, 0.0
        %v1514 = vmax.f32 %v1246, 0.0
        %v1515 = vmax.f32 %v1251, 0.0
        %v1516 = vmax.f32 %v1254, 0.0
        %v1517 = vmax.f32 %v1259, 0.0
        %v1518 = vmax.f32 %v1262, 0.0
        %v1519 = vmax.f32 %v1267, 0.0
        %v1520 = vmax.f32 %v1270, 0.0
        %v1521 = vmax.f32 %v1275, 0.0
        %v1522 = vmax.f32 %v1278, 0.0
        %v1523 = vmax.f32 %v1283, 0.0
        %v1524 = vmax.f32 %v1286, 0.0
        %v1525 = vmax.f32 %v1291, 0.0
        %v1526 = vmax.f32 %v1294, 0.0
        %v1527 = vmax.f32 %v1299, 0.0
        %v1528 = vmax.f32 %v1302, 0.0
        %v1529 = vmax.f32 %v1307, 0.0
        %v1530 = vmax.f32 %v1310, 0.0
        %v1531 = vmax.f32 %v1315, 0.0
        %v1532 = vmax.f32 %v1318, 0.0
        %v1533 = vmax.f32 %v1323, 0.0
        %v1534 = vmax.f32 %v1326, 0.0
        %v1535 = vmax.f32 %v1331, 0.0
        %v1536 = vmax.f32 %v1334, 0.0
        %v1537 = vmax.f32 %v1339, 0.0
        %v1538 = vmax.f32 %v1342, 0.0
        %v1539 = vmax.f32 %v1347, 0.0
        %v1540 = vmax.f32 %v1350, 0.0
        %v1541 = vmax.f32 %v1355, 0.0
        %v1542 = vmax.f32 %v1358, 0.0
        %v1543 = vmax.f32 %v1363, 0.0
        %v1544 = vmax.f32 %v1366, 0.0
        %v1545 = vmax.f32 %v1371, 0.0
        %v1546 = vmax.f32 %v1374, 0.0
        %v1547 = vmax.f32 %v1379, 0.0
        %v1548 = vmax.f32 %v1382, 0.0
        %v1549 = vmax.f32 %v1387, 0.0
        %v1550 = vmax.f32 %v1390, 0.0
        %v1551 = vmax.f32 %v1395, 0.0
        %v1552 = vmax.f32 %v1398, 0.0
        %v1553 = vmax.f32 %v1403, 0.0
        %v1554 = vmax.f32 %v1406, 0.0
        %v1555 = vmax.f32 %v1411, 0.0
        %v1556 = vmax.f32 %v1414, 0.0
        %v1557 = vmax.f32 %v1419, 0.0
        %v1558 = vmax.f32 %v1422, 0.0
        %v1559 = vmax.f32 %v1427, 0.0
        %v1560 = vmax.f32 %v1430, 0.0
        %1561 = vst [vmem:[%s202] sm:$0xff] %v1433
        %1562 = vst [vmem:[%s202 + $0x8] sm:$0xff] %v1434
        %1563 = vst [vmem:[%s202 + $0x10] sm:$0xff] %v1435
        %1564 = vst [vmem:[%s202 + $0x18] sm:$0xff] %v1436
        %1565 = vst [vmem:[%s202 + $0x20] sm:$0xff] %v1437
        %1566 = vst [vmem:[%s202 + $0x28] sm:$0xff] %v1438
        %1567 = vst [vmem:[%s202 + $0x30] sm:$0xff] %v1439
        %1568 = vst [vmem:[%s202 + $0x38] sm:$0xff] %v1440
        %1569 = vst [vmem:[%s202 + $0x40] sm:$0xff] %v1441
        %1570 = vst [vmem:[%s202 + $0x48] sm:$0xff] %v1442
        %1571 = vst [vmem:[%s202 + $0x50] sm:$0xff] %v1443
        %1572 = vst [vmem:[%s202 + $0x58] sm:$0xff] %v1444
        %1573 = vst [vmem:[%s202 + $0x60] sm:$0xff] %v1445
        %1574 = vst [vmem:[%s202 + $0x68] sm:$0xff] %v1446
        %1575 = vst [vmem:[%s202 + $0x70] sm:$0xff] %v1447
        %1576 = vst [vmem:[%s202 + $0x78] sm:$0xff] %v1448
        %1577 = vst [vmem:[%s202 + $0x80] sm:$0xff] %v1449
        %1578 = vst [vmem:[%s202 + $0x88] sm:$0xff] %v1450
        %1579 = vst [vmem:[%s202 + $0x90] sm:$0xff] %v1451
        %1580 = vst [vmem:[%s202 + $0x98] sm:$0xff] %v1452
        %1581 = vst [vmem:[%s202 + $0xa0] sm:$0xff] %v1453
        %1582 = vst [vmem:[%s202 + $0xa8] sm:$0xff] %v1454
        %1583 = vst [vmem:[%s202 + $0xb0] sm:$0xff] %v1455
        %1584 = vst [vmem:[%s202 + $0xb8] sm:$0xff] %v1456
        %1585 = vst [vmem:[%s202 + $0xc0] sm:$0xff] %v1457
        %1586 = vst [vmem:[%s202 + $0xc8] sm:$0xff] %v1458
        %1587 = vst [vmem:[%s202 + $0xd0] sm:$0xff] %v1459
        %1588 = vst [vmem:[%s202 + $0xd8] sm:$0xff] %v1460
        %1589 = vst [vmem:[%s202 + $0xe0] sm:$0xff] %v1461
        %1590 = vst [vmem:[%s202 + $0xe8] sm:$0xff] %v1462
        %1591 = vst [vmem:[%s202 + $0xf0] sm:$0xff] %v1463
        %1592 = vst [vmem:[%s202 + $0xf8] sm:$0xff] %v1464
        %1593 = vst [vmem:[%s202 + $0x100] sm:$0xff] %v1465
        %1594 = vst [vmem:[%s202 + $0x108] sm:$0xff] %v1466
        %1595 = vst [vmem:[%s202 + $0x110] sm:$0xff] %v1467
        %1596 = vst [vmem:[%s202 + $0x118] sm:$0xff] %v1468
        %1597 = vst [vmem:[%s202 + $0x120] sm:$0xff] %v1469
        %1598 = vst [vmem:[%s202 + $0x128] sm:$0xff] %v1470
        %1599 = vst [vmem:[%s202 + $0x130] sm:$0xff] %v1471
        %1600 = vst [vmem:[%s202 + $0x138] sm:$0xff] %v1472
        %1601 = vst [vmem:[%s202 + $0x140] sm:$0xff] %v1473
        %1602 = vst [vmem:[%s202 + $0x148] sm:$0xff] %v1474
        %1603 = vst [vmem:[%s202 + $0x150] sm:$0xff] %v1475
        %1604 = vst [vmem:[%s202 + $0x158] sm:$0xff] %v1476
        %1605 = vst [vmem:[%s202 + $0x160] sm:$0xff] %v1477
        %1606 = vst [vmem:[%s202 + $0x168] sm:$0xff] %v1478
        %1607 = vst [vmem:[%s202 + $0x170] sm:$0xff] %v1479
        %1608 = vst [vmem:[%s202 + $0x178] sm:$0xff] %v1480
        %1609 = vst [vmem:[%s202 + $0x180] sm:$0xff] %v1481
        %1610 = vst [vmem:[%s202 + $0x188] sm:$0xff] %v1482
        %1611 = vst [vmem:[%s202 + $0x190] sm:$0xff] %v1483
        %1612 = vst [vmem:[%s202 + $0x198] sm:$0xff] %v1484
        %1613 = vst [vmem:[%s202 + $0x1a0] sm:$0xff] %v1485
        %1614 = vst [vmem:[%s202 + $0x1a8] sm:$0xff] %v1486
        %1615 = vst [vmem:[%s202 + $0x1b0] sm:$0xff] %v1487
        %1616 = vst [vmem:[%s202 + $0x1b8] sm:$0xff] %v1488
        %1617 = vst [vmem:[%s202 + $0x1c0] sm:$0xff] %v1489
        %1618 = vst [vmem:[%s202 + $0x1c8] sm:$0xff] %v1490
        %1619 = vst [vmem:[%s202 + $0x1d0] sm:$0xff] %v1491
        %1620 = vst [vmem:[%s202 + $0x1d8] sm:$0xff] %v1492
        %1621 = vst [vmem:[%s202 + $0x1e0] sm:$0xff] %v1493
        %1622 = vst [vmem:[%s202 + $0x1e8] sm:$0xff] %v1494
        %1623 = vst [vmem:[%s202 + $0x1f0] sm:$0xff] %v1495
        %1624 = vst [vmem:[%s202 + $0x1f8] sm:$0xff] %v1496
        %1625 = vst [vmem:[%s202 + $0x200] sm:$0xff] %v1497
        %1626 = vst [vmem:[%s202 + $0x208] sm:$0xff] %v1498
        %1627 = vst [vmem:[%s202 + $0x210] sm:$0xff] %v1499
        %1628 = vst [vmem:[%s202 + $0x218] sm:$0xff] %v1500
        %1629 = vst [vmem:[%s202 + $0x220] sm:$0xff] %v1501
        %1630 = vst [vmem:[%s202 + $0x228] sm:$0xff] %v1502
        %1631 = vst [vmem:[%s202 + $0x230] sm:$0xff] %v1503
        %1632 = vst [vmem:[%s202 + $0x238] sm:$0xff] %v1504
        %1633 = vst [vmem:[%s202 + $0x240] sm:$0xff] %v1505
        %1634 = vst [vmem:[%s202 + $0x248] sm:$0xff] %v1506
        %1635 = vst [vmem:[%s202 + $0x250] sm:$0xff] %v1507
        %1636 = vst [vmem:[%s202 + $0x258] sm:$0xff] %v1508
        %1637 = vst [vmem:[%s202 + $0x260] sm:$0xff] %v1509
        %1638 = vst [vmem:[%s202 + $0x268] sm:$0xff] %v1510
        %1639 = vst [vmem:[%s202 + $0x270] sm:$0xff] %v1511
        %1640 = vst [vmem:[%s202 + $0x278] sm:$0xff] %v1512
        %1641 = vst [vmem:[%s202 + $0x280] sm:$0xff] %v1513
        %1642 = vst [vmem:[%s202 + $0x288] sm:$0xff] %v1514
        %1643 = vst [vmem:[%s202 + $0x290] sm:$0xff] %v1515
        %1644 = vst [vmem:[%s202 + $0x298] sm:$0xff] %v1516
        %1645 = vst [vmem:[%s202 + $0x2a0] sm:$0xff] %v1517
        %1646 = vst [vmem:[%s202 + $0x2a8] sm:$0xff] %v1518
        %1647 = vst [vmem:[%s202 + $0x2b0] sm:$0xff] %v1519
        %1648 = vst [vmem:[%s202 + $0x2b8] sm:$0xff] %v1520
        %1649 = vst [vmem:[%s202 + $0x2c0] sm:$0xff] %v1521
        %1650 = vst [vmem:[%s202 + $0x2c8] sm:$0xff] %v1522
        %1651 = vst [vmem:[%s202 + $0x2d0] sm:$0xff] %v1523
        %1652 = vst [vmem:[%s202 + $0x2d8] sm:$0xff] %v1524
        %1653 = vst [vmem:[%s202 + $0x2e0] sm:$0xff] %v1525
        %1654 = vst [vmem:[%s202 + $0x2e8] sm:$0xff] %v1526
        %1655 = vst [vmem:[%s202 + $0x2f0] sm:$0xff] %v1527
        %1656 = vst [vmem:[%s202 + $0x2f8] sm:$0xff] %v1528
        %1657 = vst [vmem:[%s202 + $0x300] sm:$0xff] %v1529
        %1658 = vst [vmem:[%s202 + $0x308] sm:$0xff] %v1530
        %1659 = vst [vmem:[%s202 + $0x310] sm:$0xff] %v1531
        %1660 = vst [vmem:[%s202 + $0x318] sm:$0xff] %v1532
        %1661 = vst [vmem:[%s202 + $0x320] sm:$0xff] %v1533
        %1662 = vst [vmem:[%s202 + $0x328] sm:$0xff] %v1534
        %1663 = vst [vmem:[%s202 + $0x330] sm:$0xff] %v1535
        %1664 = vst [vmem:[%s202 + $0x338] sm:$0xff] %v1536
        %1665 = vst [vmem:[%s202 + $0x340] sm:$0xff] %v1537
        %1666 = vst [vmem:[%s202 + $0x348] sm:$0xff] %v1538
        %1667 = vst [vmem:[%s202 + $0x350] sm:$0xff] %v1539
        %1668 = vst [vmem:[%s202 + $0x358] sm:$0xff] %v1540
        %1669 = vst [vmem:[%s202 + $0x360] sm:$0xff] %v1541
        %1670 = vst [vmem:[%s202 + $0x368] sm:$0xff] %v1542
        %1671 = vst [vmem:[%s202 + $0x370] sm:$0xff] %v1543
        %1672 = vst [vmem:[%s202 + $0x378] sm:$0xff] %v1544
        %1673 = vst [vmem:[%s202 + $0x380] sm:$0xff] %v1545
        %1674 = vst [vmem:[%s202 + $0x388] sm:$0xff] %v1546
        %1675 = vst [vmem:[%s202 + $0x390] sm:$0xff] %v1547
        %1676 = vst [vmem:[%s202 + $0x398] sm:$0xff] %v1548
        %1677 = vst [vmem:[%s202 + $0x3a0] sm:$0xff] %v1549
        %1678 = vst [vmem:[%s202 + $0x3a8] sm:$0xff] %v1550
        %1679 = vst [vmem:[%s202 + $0x3b0] sm:$0xff] %v1551
        %1680 = vst [vmem:[%s202 + $0x3b8] sm:$0xff] %v1552
        %1681 = vst [vmem:[%s202 + $0x3c0] sm:$0xff] %v1553
        %1682 = vst [vmem:[%s202 + $0x3c8] sm:$0xff] %v1554
        %1683 = vst [vmem:[%s202 + $0x3d0] sm:$0xff] %v1555
        %1684 = vst [vmem:[%s202 + $0x3d8] sm:$0xff] %v1556
        %1685 = vst [vmem:[%s202 + $0x3e0] sm:$0xff] %v1557
        %1686 = vst [vmem:[%s202 + $0x3e8] sm:$0xff] %v1558
        %1687 = vst [vmem:[%s202 + $0x3f0] sm:$0xff] %v1559
        %1688 = vst [vmem:[%s202 + $0x3f8] sm:$0xff] %v1560
        %s1689 = sand.u32 %s117, 1
        %s1690 = scalar_lea.sflag [#allocation3], %s1689
        %s1691 = sand.u32 %s117, 1
        %s1692 = smul.addr %s1691, 1024
        %s1693 = scalar_lea.vmem [#allocation2], %s1692
        // Predicated region
        $region33: #{tpu_custom_call.1} parent=31 // pred_check
          %p1694 = pneg %p127
        $region34: #{tpu_custom_call.1} parent=31 // pred_check_branch
          %1696 = sbr.rel (%p1694) target = $region36
        $region35: #{tpu_custom_call.1} parent=31 // pred_region
          %s1697 = smul.u32 128, %s21
          %s1699 = ssub.s32 16384, 16384
          %1700 = vsyncadd %s1690, %s1699
          %s1701 = sadd.s32 %s22, %s1697
          %s1702 = smul.addr %s1701, 128
          %s1703 = scalar_lea.hbm %s3, %s1702
          %s1704 = sshll.u32 %s1693, 4
          %s1705 = int_to_ptr.vmem [resolvable:$true] %s1704
          %1710 = dma.vmem_to_hbm [thread:$0]  %s1705, 16384, %s1703, %s1690, 128, 128, 8
        $region36: #{tpu_custom_call.1} parent=31 // pred_fallthru
          _
      $region32: #{tpu_custom_call.1} parent=5 // pred_fallthru
        _
      %p1711 = scmp.le.s32.totalorder 2, %s12
      // Predicated region
      $region37: #{tpu_custom_call.1} parent=5 // pred_check
        %p1712 = pneg %p1711
      $region38: #{tpu_custom_call.1} parent=5 // pred_check_branch
        %1714 = sbr.rel (%p1712) target = $region40
      $region39: #{tpu_custom_call.1} parent=5 // pred_region
        %s1715 = ssub.s32 %s12, 2
        // Predicated region
        $region41: #{tpu_custom_call.1} parent=39 // pred_check
          %p1716 = pneg %p133
        $region42: #{tpu_custom_call.1} parent=39 // pred_check_branch
          %1718 = sbr.rel (%p1716) target = $region44
        $region43: #{tpu_custom_call.1} parent=39 // pred_region
          %s1719 = sand.u32 %s118, 1
          %s1720 = scalar_lea.sflag [#allocation3], %s1719
          %s1721 = sand.u32 %s118, 1
          %s1722 = smul.addr %s1721, 1024
          %s1723 = scalar_lea.vmem [#allocation2], %s1722
          %1724 = dma.done %s1720, 16384
        $region44: #{tpu_custom_call.1} parent=39 // pred_fallthru
          _
      $region40: #{tpu_custom_call.1} parent=5 // pred_fallthru
        _
    $region6: #{tpu_custom_call.1} parent=1 // loop_footer
      %s16 = sadd.s32 1, %s12
    $region7: #{tpu_custom_call.1} parent=1 // loop_footer_branch
      %11 = sbr.rel target = $region3
    $region8: #{tpu_custom_call.1} parent=1 // loop_exit
      _
    %1725 = vsyncpa [#allocation3], 1
    %s1726 = scalar_lea.sflag [#allocation3], 1
    %1727 = vsyncpa %s1726, 1

</llo_original>
